<compile_context>
chip_gen: v7x
topology: tpu7x:2x2x1
jax: 0.10.0
libtpu: 0.0.40
codegen_flags: <defaults>
</compile_context>

<pallas_src>
import functools

import jax
import jax.numpy as jnp
from jax.experimental import pallas as pl
from jax.experimental.pallas import tpu as pltpu


# ---------------------------------------------------------------------------
# Shared in-kernel tail: masked mean pooling over S, then projection.
# ---------------------------------------------------------------------------
def _pool_project_write(emb, m_f32, w_ref, out_ref, *, s_chunk):
    """emb: [TB,S,E] bf16 value, m_f32: [TB,S] f32 value, w_ref: [E,H] bf16 ref."""
    tb, s, e = emb.shape
    # Keep the dominant [TB,S,E] multiply in bf16 (packed vregs; ~2x VPU
    # throughput on v6e/v7x).  On v5e this promotes internally but stays correct.
    m16 = m_f32.astype(jnp.bfloat16)

    # Chunked weighted reduce over S: bf16 multiply, f32 accumulation.  The
    # static Python loop is fully unrolled; chunking bounds the per-chunk
    # intermediate so larger TB/S/E don't blow past the 64-vreg file.
    acc = jnp.zeros((tb, e), jnp.float32)
    for c0 in range(0, s, s_chunk):
        mc = m16[:, c0:c0 + s_chunk]                                  # [TB, sc]
        prod = emb[:, c0:c0 + s_chunk, :] * mc[:, :, None]            # bf16 VPU
        acc = acc + jnp.sum(prod, axis=1, dtype=jnp.float32)          # f32 acc

    # Pool-then-project reassociation: m @ (X W) == (m X) W.  Single small
    # native bf16 MXU matmul with f32 accumulation.
    sum_emb = jnp.dot(acc.astype(jnp.bfloat16), w_ref[...],
                      preferred_element_type=jnp.float32)             # [TB, H]

    # Exact mask-sum (f32) and exact divide (accuracy is free here).
    sum_mask = jnp.maximum(jnp.sum(m_f32, axis=1, keepdims=True), 1e-9)
    out_ref[...] = (sum_emb / sum_mask).astype(out_ref.dtype)


# ---------------------------------------------------------------------------
# Primary kernel: gather fused into the kernel (VMEM-resident table).
# ---------------------------------------------------------------------------
def _csbert_fused_kernel(ids_ref, m_ref, tab_ref, w_ref, out_ref, *, s_chunk):
    # ids_ref : [TB, S] int32  token ids
    # m_ref   : [TB, S] f32    combined mask (c_mask * attention_mask)
    # tab_ref : [V, E]  bf16   full embedding table (constant index_map -> one DMA)
    # w_ref   : [E, H]  bf16   projection weight (constant index_map -> one DMA)
    # out_ref : [TB, H] f32    pooled sentence embeddings
    tb, s = ids_ref.shape
    flat_ids = ids_ref[...].reshape(tb * s)
    emb = jnp.take(tab_ref[...], flat_ids, axis=0)        # [TB*S, E] bf16, in-VMEM gather
    emb = emb.reshape(tb, s, -1)                           # [TB, S, E]
    _pool_project_write(emb, m_ref[...], w_ref, out_ref, s_chunk=s_chunk)


# ---------------------------------------------------------------------------
# Fallback kernel: embeddings pre-gathered by XLA (bf16, written once, read once).
# ---------------------------------------------------------------------------
def _csbert_pregathered_kernel(emb_ref, m_ref, w_ref, out_ref, *, s_chunk):
    _pool_project_write(emb_ref[...], m_ref[...], w_ref, out_ref, s_chunk=s_chunk)


# ---------------------------------------------------------------------------
# pallas_call wrappers (batch must already be a multiple of tb).
# ---------------------------------------------------------------------------
_VMEM_LIMIT = 48 * 1024 * 1024  # safe on v7x (64 MiB); raise to ~96 MiB on v5e/v6e
                                # when a realistic embedding table must stay resident.


def contextual_sbert_pool_fused(ids, m, emb_table, w_proj, *, tb=8, s_chunk=64,
                                vmem_limit_bytes=_VMEM_LIMIT):
    """ids:[B,S] i32, m:[B,S] f32, emb_table:[V,E] bf16, w_proj:[E,H] bf16 -> [B,H] f32."""
    B, S = ids.shape
    V, E = emb_table.shape
    H = w_proj.shape[1]
    assert B % tb == 0, "pad the batch (cheap [B,S] arrays) before calling"
    n_blocks = B // tb

    kernel = functools.partial(_csbert_fused_kernel, s_chunk=min(s_chunk, S))
    return pl.pallas_call(
        kernel,
        out_shape=jax.ShapeDtypeStruct((B, H), jnp.float32),
        grid_spec=pltpu.PrefetchScalarGridSpec(
            num_scalar_prefetch=0,
            grid=(n_blocks,),
            in_specs=[
                pl.BlockSpec((tb, S), lambda b: (b, 0)),       # ids      (i32)
                pl.BlockSpec((tb, S), lambda b: (b, 0)),       # combined mask (f32)
                # Full table / weight with constant index_map: DMA'd once and
                # reused across all grid steps.  (pl.Buffered(1) would reclaim
                # the second copy; negligible at these sizes, worthwhile for
                # multi-MiB tables.)
                pl.BlockSpec((V, E), lambda b: (0, 0)),        # table    (bf16)
                pl.BlockSpec((E, H), lambda b: (0, 0)),        # weight   (bf16)
            ],
            out_specs=pl.BlockSpec((tb, H), lambda b: (b, 0)),
        ),
        compiler_params=pltpu.CompilerParams(
            dimension_semantics=("parallel",),       # shard grid over v7x's 2 TCs
            vmem_limit_bytes=vmem_limit_bytes,
        ),
    )(ids, m, emb_table, w_proj)


def contextual_sbert_pool_pregathered(embeds, m, w_proj, *, tb=8, s_chunk=64,
                                      vmem_limit_bytes=_VMEM_LIMIT):
    """embeds:[B,S,E] bf16, m:[B,S] f32, w_proj:[E,H] bf16 -> [B,H] f32."""
    B, S, E = embeds.shape
    H = w_proj.shape[1]
    assert B % tb == 0, "pad ids/masks before the gather so embeds is born padded"
    n_blocks = B // tb

    kernel = functools.partial(_csbert_pregathered_kernel, s_chunk=min(s_chunk, S))
    return pl.pallas_call(
        kernel,
        out_shape=jax.ShapeDtypeStruct((B, H), jnp.float32),
        grid_spec=pltpu.PrefetchScalarGridSpec(
            num_scalar_prefetch=0,
            grid=(n_blocks,),
            in_specs=[
                pl.BlockSpec((tb, S, E), lambda b: (b, 0, 0)),  # embeddings (bf16)
                pl.BlockSpec((tb, S), lambda b: (b, 0)),        # combined mask
                pl.BlockSpec((E, H), lambda b: (0, 0)),         # weight (bf16)
            ],
            out_specs=pl.BlockSpec((tb, H), lambda b: (b, 0)),
        ),
        compiler_params=pltpu.CompilerParams(
            dimension_semantics=("parallel",),
            vmem_limit_bytes=vmem_limit_bytes,
        ),
    )(embeds, m, w_proj)


# ---------------------------------------------------------------------------
# Full forward (stand-in backbone head + contextual masked mean pooling).
# ---------------------------------------------------------------------------
def _pad_batch(x, b_pad):
    b = x.shape[0]
    if b == b_pad:
        return x
    return jnp.pad(x, ((0, b_pad - b),) + ((0, 0),) * (x.ndim - 1))


def contextual_sbert_forward(ids, attention_mask, c_mask, emb_table, w_proj, *, tb=8):
    B, S = ids.shape
    m = (c_mask * attention_mask).astype(jnp.float32)   # single combined mask stream
    tab16 = emb_table.astype(jnp.bfloat16)
    w16 = w_proj.astype(jnp.bfloat16)

    # Pad only the cheap [B, S] inputs; no [B,S,E]-sized tensor is ever padded.
    # Padded rows have all-zero masks (clamped to 1e-9 -> exact 0 output) and
    # are sliced off at the end.
    b_pad = pl.cdiv(B, tb) * tb
    ids_p = _pad_batch(ids, b_pad)
    m_p = _pad_batch(m, b_pad)

    try:
        # Primary path: gather fused into the kernel; [B,S,E] never hits HBM.
        out = contextual_sbert_pool_fused(ids_p, m_p, tab16, w16, tb=tb)
        out = jax.block_until_ready(out)
    except Exception:
        # TODO(synk): in-kernel gather (jnp.take on a VMEM-resident table) not
        # supported by this backend/JAX version; fall back to the two-pass
        # path (XLA gather writes the bf16 [B,S,E] once, Pallas reads it
        # once).  For v7x with tables that exceed VMEM, a manual
        # double-buffered DMA row-gather (memory_space=pl.ANY) is the next step.
        embeds = tab16[ids_p]                            # bf16 [b_pad, S, E]
        out = contextual_sbert_pool_pregathered(embeds, m_p, w16, tb=tb)
    return out[:B]


# ---------------------------------------------------------------------------
# Pure-JAX reference mirroring mean_pooling_c semantics (original op order).
# ---------------------------------------------------------------------------
def _reference(ids, attention_mask, c_mask, emb_table, w_proj):
    tok = jnp.einsum("bse,eh->bsh", emb_table[ids].astype(jnp.float32),
                     w_proj.astype(jnp.float32))
    m = (c_mask * attention_mask).astype(jnp.float32)           # [B, S]
    sum_emb = jnp.sum(m[:, :, None] * tok, axis=1)              # [B, H]
    sum_mask = jnp.maximum(jnp.sum(m, axis=1, keepdims=True), 1e-9)
    return sum_emb / sum_mask


if __name__ == "__main__":
    # Small, deterministic shapes.  B=32 with TB=8 gives a 4-step grid
    # (>= 2 steps per TensorCore on v7x so the pipeline actually overlaps);
    # S/E/H multiples of 128 keep every block lane-dense.
    B, S, E, H, VOCAB = 32, 128, 128, 128, 256

    key = jax.random.PRNGKey(0)
    k_tab, k_w, k_ids, k_attn, k_cmask = jax.random.split(key, 5)

    emb_table = (jax.random.normal(k_tab, (VOCAB, E), dtype=jnp.float32)
                 * 0.02).astype(jnp.bfloat16)
    w_proj = (jax.random.normal(k_w, (E, H), dtype=jnp.float32)
              * 0.1).astype(jnp.bfloat16)

    ids = jax.random.randint(k_ids, (B, S), 0, VOCAB, dtype=jnp.int32)
    attention_mask = (jax.random.uniform(k_attn, (B, S)) > 0.2).astype(jnp.int32)
    c_mask = (jax.random.uniform(k_cmask, (B, S)) > 0.4).astype(jnp.int32)
    # Ensure at least one valid token per row so pooling is non-degenerate.
    attention_mask = attention_mask.at[:, 0].set(1)
    c_mask = c_mask.at[:, 0].set(1)

    out = contextual_sbert_forward(ids, attention_mask, c_mask, emb_table, w_proj)
    out = jax.block_until_ready(out)

    ref = _reference(ids, attention_mask, c_mask, emb_table, w_proj)
    assert out.shape == (B, H)
    # Tolerance covers bf16 gather/product/projection rounding and the
    # pool-then-project reassociation; both paths see identical bf16 inputs
    # and all reductions accumulate in f32.
    assert jnp.allclose(out, ref, rtol=2e-2, atol=2e-3), "mismatch vs reference"

    print("KERNEL_OK")
</pallas_src>

<mosaic_0001>
module attributes {stable_mosaic.version = 11 : i64} {
  func.func @_csbert_pregathered_kernel(%arg0: i32, %arg1: memref<8x128x128xbf16, #tpu.memory_space<vmem>>, %arg2: memref<8x128xf32, #tpu.memory_space<vmem>>, %arg3: memref<128x128xbf16, #tpu.memory_space<vmem>>, %arg4: memref<8x128xf32, #tpu.memory_space<vmem>>) attributes {dimension_semantics = [#tpu.dimension_semantics<parallel>], iteration_bounds = array<i64: 4>, scalar_prefetch = 0 : i64, scratch_operands = 0 : i64, tpu.core_type = #tpu.core_type<tc>, window_params = [{transform_indices = @transform_0, window_bounds = array<i64: 8, 128, 128>}, {transform_indices = @transform_1, window_bounds = array<i64: 8, 128>}, {pipeline_mode = #tpu.pipeline_mode<synchronous>, transform_indices = @transform_2, window_bounds = array<i64: 128, 128>}, {transform_indices = @transform_3, window_bounds = array<i64: 8, 128>}]} {
    %c0 = arith.constant 0 : index
    %c0_0 = arith.constant 0 : index
    %c0_1 = arith.constant 0 : index
    %0 = vector.load %arg1[%c0, %c0_0, %c0_1] : memref<8x128x128xbf16, #tpu.memory_space<vmem>>, vector<8x128x128xbf16>
    %c0_2 = arith.constant 0 : index
    %c0_3 = arith.constant 0 : index
    %1 = vector.load %arg2[%c0_2, %c0_3] : memref<8x128xf32, #tpu.memory_space<vmem>>, vector<8x128xf32>
    %2 = arith.truncf %1 : vector<8x128xf32> to vector<8x128xbf16>
    %cst = arith.constant 0.000000e+00 : f32
    %3 = vector.broadcast %cst : f32 to vector<8x128xf32>
    %4 = vector.extract_strided_slice %2 {offsets = [0, 0], sizes = [8, 64], strides = [1, 1]} : vector<8x128xbf16> to vector<8x64xbf16>
    %5 = vector.extract_strided_slice %0 {offsets = [0, 0, 0], sizes = [8, 64, 128], strides = [1, 1, 1]} : vector<8x128x128xbf16> to vector<8x64x128xbf16>
    %6 = vector.shape_cast %4 : vector<8x64xbf16> to vector<8x64x1xbf16>
    %7 = vector.broadcast %6 : vector<8x64x1xbf16> to vector<8x64x128xbf16>
    %8 = arith.mulf %5, %7 : vector<8x64x128xbf16>
    %9 = arith.extf %8 : vector<8x64x128xbf16> to vector<8x64x128xf32>
    %cst_4 = arith.constant dense<0.000000e+00> : vector<8x128xf32>
    %10 = vector.multi_reduction <add>, %9, %cst_4 [1] : vector<8x64x128xf32> to vector<8x128xf32>
    %11 = arith.addf %3, %10 : vector<8x128xf32>
    %12 = vector.extract_strided_slice %2 {offsets = [0, 64], sizes = [8, 64], strides = [1, 1]} : vector<8x128xbf16> to vector<8x64xbf16>
    %13 = vector.extract_strided_slice %0 {offsets = [0, 64, 0], sizes = [8, 64, 128], strides = [1, 1, 1]} : vector<8x128x128xbf16> to vector<8x64x128xbf16>
    %14 = vector.shape_cast %12 : vector<8x64xbf16> to vector<8x64x1xbf16>
    %15 = vector.broadcast %14 : vector<8x64x1xbf16> to vector<8x64x128xbf16>
    %16 = arith.mulf %13, %15 : vector<8x64x128xbf16>
    %17 = arith.extf %16 : vector<8x64x128xbf16> to vector<8x64x128xf32>
    %cst_5 = arith.constant dense<0.000000e+00> : vector<8x128xf32>
    %18 = vector.multi_reduction <add>, %17, %cst_5 [1] : vector<8x64x128xf32> to vector<8x128xf32>
    %19 = arith.addf %11, %18 : vector<8x128xf32>
    %20 = arith.truncf %19 : vector<8x128xf32> to vector<8x128xbf16>
    %c0_6 = arith.constant 0 : index
    %c0_7 = arith.constant 0 : index
    %21 = vector.load %arg3[%c0_6, %c0_7] : memref<128x128xbf16, #tpu.memory_space<vmem>>, vector<128x128xbf16>
    %cst_8 = arith.constant dense<0.000000e+00> : vector<8x128xf32>
    %22 = tpu.matmul %20, %21, %cst_8 {dimension_numbers = #tpu.dot_dimension_numbers<[1], [0], [0], [1], [0, 0, 1, 1], [], []>} : vector<8x128xbf16>, vector<128x128xbf16>, vector<8x128xf32> -> vector<8x128xf32>
    %cst_9 = arith.constant dense<0.000000e+00> : vector<8xf32>
    %23 = vector.multi_reduction <add>, %1, %cst_9 [1] : vector<8x128xf32> to vector<8xf32>
    %24 = vector.shape_cast %23 : vector<8xf32> to vector<8x1xf32>
    %cst_10 = arith.constant 9.99999971E-10 : f32
    %25 = vector.broadcast %cst_10 : f32 to vector<8x1xf32>
    %26 = arith.maximumf %24, %25 : vector<8x1xf32>
    %27 = vector.broadcast %26 : vector<8x1xf32> to vector<8x128xf32>
    %28 = arith.divf %22, %27 : vector<8x128xf32>
    %c0_11 = arith.constant 0 : index
    %c0_12 = arith.constant 0 : index
    %29 = vector.load %arg4[%c0_11, %c0_12] : memref<8x128xf32, #tpu.memory_space<vmem>>, vector<8x128xf32>
    tpu.vector_store %arg4[%c0_11, %c0_12], %28 {strides = array<i32>} : memref<8x128xf32, #tpu.memory_space<vmem>>, vector<8x128xf32>,
    return
  }
  func.func @transform_0(%arg0: i32) -> (i32, i32, i32) {
    %c0_i32 = arith.constant 0 : i32
    %c0_i32_0 = arith.constant 0 : i32
    %c0_i32_1 = arith.constant 0 : i32
    return %arg0, %c0_i32, %c0_i32_0 : i32, i32, i32
  }
  func.func @transform_1(%arg0: i32) -> (i32, i32) {
    %c0_i32 = arith.constant 0 : i32
    %c0_i32_0 = arith.constant 0 : i32
    return %arg0, %c0_i32 : i32, i32
  }
  func.func @transform_2(%arg0: i32) -> (i32, i32) {
    %c0_i32 = arith.constant 0 : i32
    %c0_i32_0 = arith.constant 0 : i32
    %c0_i32_1 = arith.constant 0 : i32
    return %c0_i32, %c0_i32_0 : i32, i32
  }
  func.func @transform_3(%arg0: i32) -> (i32, i32) {
    %c0_i32 = arith.constant 0 : i32
    %c0_i32_0 = arith.constant 0 : i32
    return %arg0, %c0_i32 : i32, i32
  }
}

</mosaic_0001>

<llo_original>
// kernel: tpu_custom_call.1
$region0: #{tpu_custom_call.1}
  #allocation0 [shape = 'u32[]', space=smem, size = 0x4, offset = 0x4, fixed_abs, tag = 'smem constant byte address 0x4 - core index']
  #allocation1 [shape = 'u32[144,128]{1,0:T(1,128)}', space=vmem, size = 0x12000, scoped, tag = 'internal scratch']
  %s0 = inlined_call_operand.hbm [shape: bf16[32,128,128], index: 0, kind: input, shape index: {}]
  %s1 = inlined_call_operand.hbm [shape: f32[32,128], index: 1, kind: input, shape index: {}]
  %s2 = inlined_call_operand.hbm [shape: bf16[128,128], index: 2, kind: input, shape index: {}]
  %s3 = inlined_call_operand.hbm [shape: f32[32,128], index: 3, kind: output, shape index: {}]
  %s4 = sld [smem:[#allocation0]]
  $region57: #{tpu_custom_call.1} parent=0
    _
  %s6 = ssub.s32 1, %s4
  %s7 = scalar_select 0, %s6, %s4
  $region1: #{tpu_custom_call.1} parent=0
    #allocation2 [shape = 'u8[524288]{0}', space=vmem, size = 0x80000, scoped, tag = 'input window, operand 0']
    #allocation3 [shape = 's32[2]{0}', space=sflag, size = 0x8, scoped, tag = 'scoped memory for tpu_custom_call.1']
    #allocation4 [shape = 's32[2]{0}', space=sflag, size = 0x8, scoped, tag = 'scoped memory for tpu_custom_call.1']
    #allocation5 [shape = 'u8[8192]{0}', space=vmem, size = 0x2000, scoped, tag = 'input window, operand 1']
    #allocation6 [shape = 's32[2]{0}', space=sflag, size = 0x8, scoped, tag = 'scoped memory for tpu_custom_call.1']
    #allocation7 [shape = 'u8[32768]{0}', space=vmem, size = 0x8000, scoped, tag = 'input window, operand 2, single buffered']
    #allocation8 [shape = 'u8[8192]{0}', space=vmem, size = 0x2000, scoped, tag = 'output window, operand 0']
    %8 = vsyncpa [#allocation3], 0
    %s9 = scalar_lea.sflag [#allocation3], 1
    %10 = vsyncpa %s9, 0
    %11 = vsyncpa [#allocation6], 0
    %s12 = scalar_lea.sflag [#allocation6], 1
    %13 = vsyncpa %s12, 0
    %14 = vsyncpa [#allocation4], 0
    %s15 = scalar_lea.sflag [#allocation4], 1
    %16 = vsyncpa %s15, 0
    loop: start=0, step=1, limit=6
    $region2: #{tpu_custom_call.1} parent=1 // loop_pre_header
      _
    $region3: #{tpu_custom_call.1} parent=1 // loop_header
      %s18 = sphi 0, %s22
      %p19 = scmp.ge.s32.totalorder %s18, 6
      %s28 = sphi 0, %s30
      %s31 = sphi 0, %s28
      %s32 = sphi 0, %s31
      %s48 = sphi 0, %s32
      %s54 = sphi 0, %s56
      %s57 = sphi 0, %s54
      %s58 = sphi 0, %s57
      %s74 = sphi 0, %s58
      %s78 = sphi 0, %s78
      %s80 = sphi 0, %s78
      %s81 = sphi 0, %s80
      %s95 = sphi 0, %s81
      %s101 = sphi 0, %s103
      %s104 = sphi 0, %s101
      %s105 = sphi 0, %s104
      %s121 = sphi 0, %s105
    $region4: #{tpu_custom_call.1} parent=1 // loop_header_branch
      %21 = sbr.rel (%p19) target = $region8
    $region5: #{tpu_custom_call.1} parent=1 // loop_body
      %s23 = ssub.s32 %s18, 1
      %s24 = ssub.s32 %s18, 2
      %s25 = sadd.s32 %s18, 1
      %s26 = ssub.s32 %s18, %s25
      %p27 = scmp.eq.s32.totalorder %s26, 0
      %s29 = sadd.s32 %s28, 1
      %s30 = scalar_select %p27, %s28, %s29
      %p33 = pneg %p27
      %p34 = scmp.eq.s32.totalorder %s18, 3
      %p35 = por %p33, %p34
      %p36 = scmp.ne.s32.totalorder %s28, %s31
      %p37 = scmp.eq.s32.totalorder %s18, 0
      %p38 = por %p36, %p37
      %p39 = scmp.ne.s32.totalorder %s28, %s31
      %p40 = scmp.eq.s32.totalorder %s23, 3
      %p41 = por %p39, %p40
      %p42 = scmp.ne.s32.totalorder %s31, %s32
      %p43 = scmp.eq.s32.totalorder %s23, 0
      %p44 = por %p42, %p43
      %p45 = scmp.ne.s32.totalorder %s31, %s32
      %p46 = scmp.eq.s32.totalorder %s24, 3
      %p47 = por %p45, %p46
      %p49 = scmp.ne.s32.totalorder %s32, %s48
      %p50 = scmp.eq.s32.totalorder %s24, 0
      %p51 = por %p49, %p50
      %s52 = ssub.s32 %s18, %s25
      %p53 = scmp.eq.s32.totalorder %s52, 0
      %s55 = sadd.s32 %s54, 1
      %s56 = scalar_select %p53, %s54, %s55
      %p59 = pneg %p53
      %p60 = scmp.eq.s32.totalorder %s18, 3
      %p61 = por %p59, %p60
      %p62 = scmp.ne.s32.totalorder %s54, %s57
      %p63 = scmp.eq.s32.totalorder %s18, 0
      %p64 = por %p62, %p63
      %p65 = scmp.ne.s32.totalorder %s54, %s57
      %p66 = scmp.eq.s32.totalorder %s23, 3
      %p67 = por %p65, %p66
      %p68 = scmp.ne.s32.totalorder %s57, %s58
      %p69 = scmp.eq.s32.totalorder %s23, 0
      %p70 = por %p68, %p69
      %p71 = scmp.ne.s32.totalorder %s57, %s58
      %p72 = scmp.eq.s32.totalorder %s24, 3
      %p73 = por %p71, %p72
      %p75 = scmp.ne.s32.totalorder %s58, %s74
      %p76 = scmp.eq.s32.totalorder %s24, 0
      %p77 = por %p75, %p76
      %s79 = sadd.s32 %s78, 1
      %p82 = scmp.eq.s32.totalorder %s18, 3
      %p83 = scmp.ne.s32.totalorder %s78, %s80
      %p84 = scmp.eq.s32.totalorder %s18, 0
      %p85 = por %p83, %p84
      %p86 = scmp.ne.s32.totalorder %s78, %s80
      %p87 = scmp.eq.s32.totalorder %s23, 3
      %p88 = por %p86, %p87
      %p89 = scmp.ne.s32.totalorder %s80, %s81
      %p90 = scmp.eq.s32.totalorder %s23, 0
      %p91 = por %p89, %p90
      %p92 = scmp.ne.s32.totalorder %s80, %s81
      %p93 = scmp.eq.s32.totalorder %s24, 3
      %p94 = por %p92, %p93
      %p96 = scmp.ne.s32.totalorder %s81, %s95
      %p97 = scmp.eq.s32.totalorder %s24, 0
      %p98 = por %p96, %p97
      %s99 = ssub.s32 %s18, %s25
      %p100 = scmp.eq.s32.totalorder %s99, 0
      %s102 = sadd.s32 %s101, 1
      %s103 = scalar_select %p100, %s101, %s102
      %p106 = pneg %p100
      %p107 = scmp.eq.s32.totalorder %s18, 3
      %p108 = por %p106, %p107
      %p109 = scmp.ne.s32.totalorder %s101, %s104
      %p110 = scmp.eq.s32.totalorder %s18, 0
      %p111 = por %p109, %p110
      %p112 = scmp.ne.s32.totalorder %s101, %s104
      %p113 = scmp.eq.s32.totalorder %s23, 3
      %p114 = por %p112, %p113
      %p115 = scmp.ne.s32.totalorder %s104, %s105
      %p116 = scmp.eq.s32.totalorder %s23, 0
      %p117 = por %p115, %p116
      %p118 = scmp.ne.s32.totalorder %s104, %s105
      %p119 = scmp.eq.s32.totalorder %s24, 3
      %p120 = por %p118, %p119
      %p122 = scmp.ne.s32.totalorder %s105, %s121
      %p123 = scmp.eq.s32.totalorder %s24, 0
      %p124 = por %p122, %p123
      %p125 = scmp.le.s32.totalorder 1, %s18
      %p126 = scmp.lt.s32.totalorder %s18, 5
      %p127 = pnand %p125, %p126
      %p128 = pneg %p127
      // Predicated region
      $region9: #{tpu_custom_call.1} parent=5 // pred_check
        _
      $region10: #{tpu_custom_call.1} parent=5 // pred_check_branch
        %130 = sbr.rel (%p127) target = $region12
      $region11: #{tpu_custom_call.1} parent=5 // pred_region
        %s131 = ssub.s32 %s18, 1
        // Predicated region
        $region13: #{tpu_custom_call.1} parent=11 // pred_check
          %p132 = pneg %p91
        $region14: #{tpu_custom_call.1} parent=11 // pred_check_branch
          %134 = sbr.rel (%p132) target = $region16
        $region15: #{tpu_custom_call.1} parent=11 // pred_region
          %s136 = ssub.s32 1024, 1024
          %137 = vsyncadd [#allocation6], %s136
          %s138 = sshll.u32 [#allocation7], 4
          %s139 = int_to_ptr.vmem [resolvable:$true] %s138
          %144 = dma.hbm_to_vmem [thread:$0]  %s2, 1024, %s139, [#allocation6], 64, 64, 4
        $region16: #{tpu_custom_call.1} parent=11 // pred_fallthru
          _
      $region12: #{tpu_custom_call.1} parent=5 // pred_fallthru
        _
      %p145 = scmp.lt.s32.totalorder %s18, 4
      // Predicated region
      $region17: #{tpu_custom_call.1} parent=5 // pred_check
        %p146 = pneg %p145
      $region18: #{tpu_custom_call.1} parent=5 // pred_check_branch
        %148 = sbr.rel (%p146) target = $region20
      $region19: #{tpu_custom_call.1} parent=5 // pred_region
        // Predicated region
        $region21: #{tpu_custom_call.1} parent=19 // pred_check
          %p149 = pneg %p38
        $region22: #{tpu_custom_call.1} parent=19 // pred_check_branch
          %151 = sbr.rel (%p149) target = $region24
        $region23: #{tpu_custom_call.1} parent=19 // pred_region
          %s152 = sand.u32 %s28, 1
          %s153 = scalar_lea.sflag [#allocation3], %s152
          %s154 = sand.u32 %s28, 1
          %s155 = smul.addr %s154, 512
          %s156 = scalar_lea.vmem [#allocation2], %s155
          %s157 = smul.u32 8, %s18
          %s159 = ssub.s32 8192, 8192
          %160 = vsyncadd %s153, %s159
          %s161 = smul.addr %s157, 16
          %s162 = smul.addr %s161, 64
          %s163 = scalar_lea.hbm %s0, %s162
          %s164 = sshll.u32 %s156, 4
          %s165 = int_to_ptr.vmem [resolvable:$true] %s164
          %170 = dma.hbm_to_vmem [thread:$0]  %s163, 8192, %s165, %s153, 64, 64, 4
        $region24: #{tpu_custom_call.1} parent=19 // pred_fallthru
          _
        // Predicated region
        $region25: #{tpu_custom_call.1} parent=19 // pred_check
          %p171 = pneg %p64
        $region26: #{tpu_custom_call.1} parent=19 // pred_check_branch
          %173 = sbr.rel (%p171) target = $region28
        $region27: #{tpu_custom_call.1} parent=19 // pred_region
          %s174 = sand.u32 %s18, 1
          %s175 = scalar_lea.sflag [#allocation6], %s174
          %s176 = sand.u32 %s54, 1
          %s177 = smul.addr %s176, 8
          %s178 = scalar_lea.vmem [#allocation5], %s177
          %s180 = ssub.s32 128, 128
          %181 = vsyncadd %s175, %s180
          %s182 = smul.addr %s18, 128
          %s183 = scalar_lea.hbm %s1, %s182
          %s185 = sshll.u32 %s178, 4
          %s186 = int_to_ptr.vmem [resolvable:$true] %s185
          %188 = dma.hbm_to_vmem [thread:$0]  %s183, 128, %s186, %s175
        $region28: #{tpu_custom_call.1} parent=19 // pred_fallthru
          _
      $region20: #{tpu_custom_call.1} parent=5 // pred_fallthru
        _
      %p189 = scmp.le.s32.totalorder 1, %s18
      %p190 = scmp.lt.s32.totalorder %s18, 5
      %p191 = pnand %p189, %p190
      %p192 = pneg %p191
      // Predicated region
      $region29: #{tpu_custom_call.1} parent=5 // pred_check
        _
      $region30: #{tpu_custom_call.1} parent=5 // pred_check_branch
        %194 = sbr.rel (%p191) target = $region32
      $region31: #{tpu_custom_call.1} parent=5 // pred_region
        %s195 = ssub.s32 %s18, 1
        %s196 = sand.u32 %s31, 1
        %s197 = scalar_lea.sflag [#allocation3], %s196
        %s198 = sand.u32 %s31, 1
        %s199 = smul.addr %s198, 512
        %s200 = scalar_lea.vmem [#allocation2], %s199
        // Predicated region
        $region33: #{tpu_custom_call.1} parent=31 // pred_check
          %p201 = pneg %p44
        $region34: #{tpu_custom_call.1} parent=31 // pred_check_branch
          %203 = sbr.rel (%p201) target = $region36
        $region35: #{tpu_custom_call.1} parent=31 // pred_region
          %204 = dma.done %s197, 8192
        $region36: #{tpu_custom_call.1} parent=31 // pred_fallthru
          _
        %s205 = sand.u32 %s23, 1
        %s206 = scalar_lea.sflag [#allocation6], %s205
        %s207 = sand.u32 %s57, 1
        %s208 = smul.addr %s207, 8
        %s209 = scalar_lea.vmem [#allocation5], %s208
        // Predicated region
        $region37: #{tpu_custom_call.1} parent=31 // pred_check
          %p210 = pneg %p70
        $region38: #{tpu_custom_call.1} parent=31 // pred_check_branch
          %212 = sbr.rel (%p210) target = $region40
        $region39: #{tpu_custom_call.1} parent=31 // pred_region
          %213 = dma.done %s206, 128
        $region40: #{tpu_custom_call.1} parent=31 // pred_fallthru
          _
        // Predicated region
        $region41: #{tpu_custom_call.1} parent=31 // pred_check
          %p214 = pneg %p91
        $region42: #{tpu_custom_call.1} parent=31 // pred_check_branch
          %216 = sbr.rel (%p214) target = $region44
        $region43: #{tpu_custom_call.1} parent=31 // pred_region
          %217 = dma.done [#allocation6], 1024
        $region44: #{tpu_custom_call.1} parent=31 // pred_fallthru
          _
        %s218 = sand.u32 %s31, 1
        %s219 = scalar_lea.sflag [#allocation3], %s218
        %s220 = sand.u32 %s31, 1
        %s221 = smul.addr %s220, 512
        %s222 = scalar_lea.vmem [#allocation2], %s221
        %p223 = pneg %p44
        %p224 = pneg %p41
        %s225 = sand.u32 %s23, 1
        %s226 = scalar_lea.sflag [#allocation6], %s225
        %s227 = sand.u32 %s57, 1
        %s228 = smul.addr %s227, 8
        %s229 = scalar_lea.vmem [#allocation5], %s228
        %p230 = pneg %p70
        %p231 = pneg %p67
        %p232 = pneg %p91
        %p233 = pneg %p88
        %p234 = pneg %p117
        %p235 = pneg %p114
        %s236 = sand.u32 %s104, 1
        %s237 = scalar_lea.sflag [#allocation4], %s236
        %s238 = sand.u32 %s104, 1
        %s239 = smul.addr %s238, 8
        %s240 = scalar_lea.vmem [#allocation8], %s239
        %s241 = smul.u32 8, %s23
        %v243 = vld [vmem:[%s200] sm:$0xf]
        %v244 = vld [vmem:[%s200 + $0x4] sm:$0xf]
        %v245 = vld [vmem:[%s200 + $0x8] sm:$0xf]
        %v246 = vld [vmem:[%s200 + $0xc] sm:$0xf]
        %v247 = vld [vmem:[%s200 + $0x10] sm:$0xf]
        %v248 = vld [vmem:[%s200 + $0x14] sm:$0xf]
        %v249 = vld [vmem:[%s200 + $0x18] sm:$0xf]
        %v250 = vld [vmem:[%s200 + $0x1c] sm:$0xf]
        %v251 = vld [vmem:[%s200 + $0x20] sm:$0xf]
        %v252 = vld [vmem:[%s200 + $0x24] sm:$0xf]
        %v253 = vld [vmem:[%s200 + $0x28] sm:$0xf]
        %v254 = vld [vmem:[%s200 + $0x2c] sm:$0xf]
        %v255 = vld [vmem:[%s200 + $0x30] sm:$0xf]
        %v256 = vld [vmem:[%s200 + $0x34] sm:$0xf]
        %v257 = vld [vmem:[%s200 + $0x38] sm:$0xf]
        %v258 = vld [vmem:[%s200 + $0x3c] sm:$0xf]
        %v259 = vld [vmem:[%s200 + $0x40] sm:$0xf]
        %v260 = vld [vmem:[%s200 + $0x44] sm:$0xf]
        %v261 = vld [vmem:[%s200 + $0x48] sm:$0xf]
        %v262 = vld [vmem:[%s200 + $0x4c] sm:$0xf]
        %v263 = vld [vmem:[%s200 + $0x50] sm:$0xf]
        %v264 = vld [vmem:[%s200 + $0x54] sm:$0xf]
        %v265 = vld [vmem:[%s200 + $0x58] sm:$0xf]
        %v266 = vld [vmem:[%s200 + $0x5c] sm:$0xf]
        %v267 = vld [vmem:[%s200 + $0x60] sm:$0xf]
        %v268 = vld [vmem:[%s200 + $0x64] sm:$0xf]
        %v269 = vld [vmem:[%s200 + $0x68] sm:$0xf]
        %v270 = vld [vmem:[%s200 + $0x6c] sm:$0xf]
        %v271 = vld [vmem:[%s200 + $0x70] sm:$0xf]
        %v272 = vld [vmem:[%s200 + $0x74] sm:$0xf]
        %v273 = vld [vmem:[%s200 + $0x78] sm:$0xf]
        %v274 = vld [vmem:[%s200 + $0x7c] sm:$0xf]
        %v275 = vld [vmem:[%s200 + $0x80] sm:$0xf]
        %v276 = vld [vmem:[%s200 + $0x84] sm:$0xf]
        %v277 = vld [vmem:[%s200 + $0x88] sm:$0xf]
        %v278 = vld [vmem:[%s200 + $0x8c] sm:$0xf]
        %v279 = vld [vmem:[%s200 + $0x90] sm:$0xf]
        %v280 = vld [vmem:[%s200 + $0x94] sm:$0xf]
        %v281 = vld [vmem:[%s200 + $0x98] sm:$0xf]
        %v282 = vld [vmem:[%s200 + $0x9c] sm:$0xf]
        %v283 = vld [vmem:[%s200 + $0xa0] sm:$0xf]
        %v284 = vld [vmem:[%s200 + $0xa4] sm:$0xf]
        %v285 = vld [vmem:[%s200 + $0xa8] sm:$0xf]
        %v286 = vld [vmem:[%s200 + $0xac] sm:$0xf]
        %v287 = vld [vmem:[%s200 + $0xb0] sm:$0xf]
        %v288 = vld [vmem:[%s200 + $0xb4] sm:$0xf]
        %v289 = vld [vmem:[%s200 + $0xb8] sm:$0xf]
        %v290 = vld [vmem:[%s200 + $0xbc] sm:$0xf]
        %v291 = vld [vmem:[%s200 + $0xc0] sm:$0xf]
        %v292 = vld [vmem:[%s200 + $0xc4] sm:$0xf]
        %v293 = vld [vmem:[%s200 + $0xc8] sm:$0xf]
        %v294 = vld [vmem:[%s200 + $0xcc] sm:$0xf]
        %v295 = vld [vmem:[%s200 + $0xd0] sm:$0xf]
        %v296 = vld [vmem:[%s200 + $0xd4] sm:$0xf]
        %v297 = vld [vmem:[%s200 + $0xd8] sm:$0xf]
        %v298 = vld [vmem:[%s200 + $0xdc] sm:$0xf]
        %v299 = vld [vmem:[%s200 + $0xe0] sm:$0xf]
        %v300 = vld [vmem:[%s200 + $0xe4] sm:$0xf]
        %v301 = vld [vmem:[%s200 + $0xe8] sm:$0xf]
        %v302 = vld [vmem:[%s200 + $0xec] sm:$0xf]
        %v303 = vld [vmem:[%s200 + $0xf0] sm:$0xf]
        %v304 = vld [vmem:[%s200 + $0xf4] sm:$0xf]
        %v305 = vld [vmem:[%s200 + $0xf8] sm:$0xf]
        %v306 = vld [vmem:[%s200 + $0xfc] sm:$0xf]
        %v307 = vld [vmem:[%s200 + $0x100] sm:$0xf]
        %v308 = vld [vmem:[%s200 + $0x104] sm:$0xf]
        %v309 = vld [vmem:[%s200 + $0x108] sm:$0xf]
        %v310 = vld [vmem:[%s200 + $0x10c] sm:$0xf]
        %v311 = vld [vmem:[%s200 + $0x110] sm:$0xf]
        %v312 = vld [vmem:[%s200 + $0x114] sm:$0xf]
        %v313 = vld [vmem:[%s200 + $0x118] sm:$0xf]
        %v314 = vld [vmem:[%s200 + $0x11c] sm:$0xf]
        %v315 = vld [vmem:[%s200 + $0x120] sm:$0xf]
        %v316 = vld [vmem:[%s200 + $0x124] sm:$0xf]
        %v317 = vld [vmem:[%s200 + $0x128] sm:$0xf]
        %v318 = vld [vmem:[%s200 + $0x12c] sm:$0xf]
        %v319 = vld [vmem:[%s200 + $0x130] sm:$0xf]
        %v320 = vld [vmem:[%s200 + $0x134] sm:$0xf]
        %v321 = vld [vmem:[%s200 + $0x138] sm:$0xf]
        %v322 = vld [vmem:[%s200 + $0x13c] sm:$0xf]
        %v323 = vld [vmem:[%s200 + $0x140] sm:$0xf]
        %v324 = vld [vmem:[%s200 + $0x144] sm:$0xf]
        %v325 = vld [vmem:[%s200 + $0x148] sm:$0xf]
        %v326 = vld [vmem:[%s200 + $0x14c] sm:$0xf]
        %v327 = vld [vmem:[%s200 + $0x150] sm:$0xf]
        %v328 = vld [vmem:[%s200 + $0x154] sm:$0xf]
        %v329 = vld [vmem:[%s200 + $0x158] sm:$0xf]
        %v330 = vld [vmem:[%s200 + $0x15c] sm:$0xf]
        %v331 = vld [vmem:[%s200 + $0x160] sm:$0xf]
        %v332 = vld [vmem:[%s200 + $0x164] sm:$0xf]
        %v333 = vld [vmem:[%s200 + $0x168] sm:$0xf]
        %v334 = vld [vmem:[%s200 + $0x16c] sm:$0xf]
        %v335 = vld [vmem:[%s200 + $0x170] sm:$0xf]
        %v336 = vld [vmem:[%s200 + $0x174] sm:$0xf]
        %v337 = vld [vmem:[%s200 + $0x178] sm:$0xf]
        %v338 = vld [vmem:[%s200 + $0x17c] sm:$0xf]
        %v339 = vld [vmem:[%s200 + $0x180] sm:$0xf]
        %v340 = vld [vmem:[%s200 + $0x184] sm:$0xf]
        %v341 = vld [vmem:[%s200 + $0x188] sm:$0xf]
        %v342 = vld [vmem:[%s200 + $0x18c] sm:$0xf]
        %v343 = vld [vmem:[%s200 + $0x190] sm:$0xf]
        %v344 = vld [vmem:[%s200 + $0x194] sm:$0xf]
        %v345 = vld [vmem:[%s200 + $0x198] sm:$0xf]
        %v346 = vld [vmem:[%s200 + $0x19c] sm:$0xf]
        %v347 = vld [vmem:[%s200 + $0x1a0] sm:$0xf]
        %v348 = vld [vmem:[%s200 + $0x1a4] sm:$0xf]
        %v349 = vld [vmem:[%s200 + $0x1a8] sm:$0xf]
        %v350 = vld [vmem:[%s200 + $0x1ac] sm:$0xf]
        %v351 = vld [vmem:[%s200 + $0x1b0] sm:$0xf]
        %v352 = vld [vmem:[%s200 + $0x1b4] sm:$0xf]
        %v353 = vld [vmem:[%s200 + $0x1b8] sm:$0xf]
        %v354 = vld [vmem:[%s200 + $0x1bc] sm:$0xf]
        %v355 = vld [vmem:[%s200 + $0x1c0] sm:$0xf]
        %v356 = vld [vmem:[%s200 + $0x1c4] sm:$0xf]
        %v357 = vld [vmem:[%s200 + $0x1c8] sm:$0xf]
        %v358 = vld [vmem:[%s200 + $0x1cc] sm:$0xf]
        %v359 = vld [vmem:[%s200 + $0x1d0] sm:$0xf]
        %v360 = vld [vmem:[%s200 + $0x1d4] sm:$0xf]
        %v361 = vld [vmem:[%s200 + $0x1d8] sm:$0xf]
        %v362 = vld [vmem:[%s200 + $0x1dc] sm:$0xf]
        %v363 = vld [vmem:[%s200 + $0x1e0] sm:$0xf]
        %v364 = vld [vmem:[%s200 + $0x1e4] sm:$0xf]
        %v365 = vld [vmem:[%s200 + $0x1e8] sm:$0xf]
        %v366 = vld [vmem:[%s200 + $0x1ec] sm:$0xf]
        %v367 = vld [vmem:[%s200 + $0x1f0] sm:$0xf]
        %v368 = vld [vmem:[%s200 + $0x1f4] sm:$0xf]
        %v369 = vld [vmem:[%s200 + $0x1f8] sm:$0xf]
        %v370 = vld [vmem:[%s200 + $0x1fc] sm:$0xf]
        %v371 = vld [vmem:[%s209] sm:$0xff]
        %v372 = vpack.c.bf16 %v371, %v371
        %v374 = vpack.i.b16 %v372, %v372
        %v376 = vlaneseq
        %v377 = vshrl.u32 %v376, 7
        %v378 = vsub.s32 0, %v377
        %v379 = vrot.slane %v374, %v378
        %381 = vbcast.lane.c.b16.xlu0 %v379, 256
        %v382 = vpop.permute.xlu0 %381
        %s384 = sor.u32 256, 16
        %385 = vbcast.lane.c.b16.xlu0 %v379, %s384
        %v386 = vpop.permute.xlu0 %385
        %s388 = sor.u32 256, 32
        %389 = vbcast.lane.c.b16.xlu0 %v379, %s388
        %v390 = vpop.permute.xlu0 %389
        %s392 = sor.u32 256, 48
        %393 = vbcast.lane.c.b16.xlu0 %v379, %s392
        %v394 = vpop.permute.xlu0 %393
        %v395 = vshrl.u32 %v372, 16
        %v396 = vpack.i.b16 %v395, %v395
        %v398 = vlaneseq
        %v399 = vshrl.u32 %v398, 7
        %v400 = vsub.s32 0, %v399
        %v401 = vrot.slane %v396, %v400
        %403 = vbcast.lane.c.b16.xlu0 %v401, 256
        %v404 = vpop.permute.xlu0 %403
        %s406 = sor.u32 256, 16
        %407 = vbcast.lane.c.b16.xlu0 %v401, %s406
        %v408 = vpop.permute.xlu0 %407
        %s410 = sor.u32 256, 32
        %411 = vbcast.lane.c.b16.xlu0 %v401, %s410
        %v412 = vpop.permute.xlu0 %411
        %s414 = sor.u32 256, 48
        %415 = vbcast.lane.c.b16.xlu0 %v401, %s414
        %v416 = vpop.permute.xlu0 %415
        %v417 = vlaneseq
        %v418 = vshrl.u32 %v417, 7
        %v419 = vsub.s32 1, %v418
        %v420 = vrot.slane %v374, %v419
        %422 = vbcast.lane.c.b16.xlu0 %v420, 256
        %v423 = vpop.permute.xlu0 %422
        %s425 = sor.u32 256, 16
        %426 = vbcast.lane.c.b16.xlu0 %v420, %s425
        %v427 = vpop.permute.xlu0 %426
        %s429 = sor.u32 256, 32
        %430 = vbcast.lane.c.b16.xlu0 %v420, %s429
        %v431 = vpop.permute.xlu0 %430
        %s433 = sor.u32 256, 48
        %434 = vbcast.lane.c.b16.xlu0 %v420, %s433
        %v435 = vpop.permute.xlu0 %434
        %v436 = vlaneseq
        %v437 = vshrl.u32 %v436, 7
        %v438 = vsub.s32 1, %v437
        %v439 = vrot.slane %v396, %v438
        %441 = vbcast.lane.c.b16.xlu0 %v439, 256
        %v442 = vpop.permute.xlu0 %441
        %s444 = sor.u32 256, 16
        %445 = vbcast.lane.c.b16.xlu0 %v439, %s444
        %v446 = vpop.permute.xlu0 %445
        %s448 = sor.u32 256, 32
        %449 = vbcast.lane.c.b16.xlu0 %v439, %s448
        %v450 = vpop.permute.xlu0 %449
        %s452 = sor.u32 256, 48
        %453 = vbcast.lane.c.b16.xlu0 %v439, %s452
        %v454 = vpop.permute.xlu0 %453
        %v455 = vlaneseq
        %v456 = vshrl.u32 %v455, 7
        %v457 = vsub.s32 2, %v456
        %v458 = vrot.slane %v374, %v457
        %460 = vbcast.lane.c.b16.xlu0 %v458, 256
        %v461 = vpop.permute.xlu0 %460
        %s463 = sor.u32 256, 16
        %464 = vbcast.lane.c.b16.xlu0 %v458, %s463
        %v465 = vpop.permute.xlu0 %464
        %s467 = sor.u32 256, 32
        %468 = vbcast.lane.c.b16.xlu0 %v458, %s467
        %v469 = vpop.permute.xlu0 %468
        %s471 = sor.u32 256, 48
        %472 = vbcast.lane.c.b16.xlu0 %v458, %s471
        %v473 = vpop.permute.xlu0 %472
        %v474 = vlaneseq
        %v475 = vshrl.u32 %v474, 7
        %v476 = vsub.s32 2, %v475
        %v477 = vrot.slane %v396, %v476
        %479 = vbcast.lane.c.b16.xlu0 %v477, 256
        %v480 = vpop.permute.xlu0 %479
        %s482 = sor.u32 256, 16
        %483 = vbcast.lane.c.b16.xlu0 %v477, %s482
        %v484 = vpop.permute.xlu0 %483
        %s486 = sor.u32 256, 32
        %487 = vbcast.lane.c.b16.xlu0 %v477, %s486
        %v488 = vpop.permute.xlu0 %487
        %s490 = sor.u32 256, 48
        %491 = vbcast.lane.c.b16.xlu0 %v477, %s490
        %v492 = vpop.permute.xlu0 %491
        %v493 = vlaneseq
        %v494 = vshrl.u32 %v493, 7
        %v495 = vsub.s32 3, %v494
        %v496 = vrot.slane %v374, %v495
        %498 = vbcast.lane.c.b16.xlu0 %v496, 256
        %v499 = vpop.permute.xlu0 %498
        %s501 = sor.u32 256, 16
        %502 = vbcast.lane.c.b16.xlu0 %v496, %s501
        %v503 = vpop.permute.xlu0 %502
        %s505 = sor.u32 256, 32
        %506 = vbcast.lane.c.b16.xlu0 %v496, %s505
        %v507 = vpop.permute.xlu0 %506
        %s509 = sor.u32 256, 48
        %510 = vbcast.lane.c.b16.xlu0 %v496, %s509
        %v511 = vpop.permute.xlu0 %510
        %v512 = vlaneseq
        %v513 = vshrl.u32 %v512, 7
        %v514 = vsub.s32 3, %v513
        %v515 = vrot.slane %v396, %v514
        %517 = vbcast.lane.c.b16.xlu0 %v515, 256
        %v518 = vpop.permute.xlu0 %517
        %s520 = sor.u32 256, 16
        %521 = vbcast.lane.c.b16.xlu0 %v515, %s520
        %v522 = vpop.permute.xlu0 %521
        %s524 = sor.u32 256, 32
        %525 = vbcast.lane.c.b16.xlu0 %v515, %s524
        %v526 = vpop.permute.xlu0 %525
        %s528 = sor.u32 256, 48
        %529 = vbcast.lane.c.b16.xlu0 %v515, %s528
        %v530 = vpop.permute.xlu0 %529
        %v564 = vunpack.c.l.s4 839922192
        %v565 = vunpack.c.0.s8 %v564
        %v566 = vlaneseq
        %v567 = vshrl.u32 %v566, 7
        %v568 = vsub.s32 %v565, %v567
        %v569 = vrot.slane %v382, %v568
        %v571 = vunpack.c.l.s4 1985246804
        %v572 = vunpack.c.0.s8 %v571
        %v573 = vlaneseq
        %v574 = vshrl.u32 %v573, 7
        %v575 = vsub.s32 %v572, %v574
        %v576 = vrot.slane %v382, %v575
        %v578 = vunpack.c.l.s4 839922192
        %v579 = vunpack.c.0.s8 %v578
        %v580 = vlaneseq
        %v581 = vshrl.u32 %v580, 7
        %v582 = vsub.s32 %v579, %v581
        %v583 = vrot.slane %v386, %v582
        %v585 = vunpack.c.l.s4 1985246804
        %v586 = vunpack.c.0.s8 %v585
        %v587 = vlaneseq
        %v588 = vshrl.u32 %v587, 7
        %v589 = vsub.s32 %v586, %v588
        %v590 = vrot.slane %v386, %v589
        %v592 = vunpack.c.l.s4 839922192
        %v593 = vunpack.c.0.s8 %v592
        %v594 = vlaneseq
        %v595 = vshrl.u32 %v594, 7
        %v596 = vsub.s32 %v593, %v595
        %v597 = vrot.slane %v390, %v596
        %v599 = vunpack.c.l.s4 1985246804
        %v600 = vunpack.c.0.s8 %v599
        %v601 = vlaneseq
        %v602 = vshrl.u32 %v601, 7
        %v603 = vsub.s32 %v600, %v602
        %v604 = vrot.slane %v390, %v603
        %v606 = vunpack.c.l.s4 839922192
        %v607 = vunpack.c.0.s8 %v606
        %v608 = vlaneseq
        %v609 = vshrl.u32 %v608, 7
        %v610 = vsub.s32 %v607, %v609
        %v611 = vrot.slane %v394, %v610
        %v613 = vunpack.c.l.s4 1985246804
        %v614 = vunpack.c.0.s8 %v613
        %v615 = vlaneseq
        %v616 = vshrl.u32 %v615, 7
        %v617 = vsub.s32 %v614, %v616
        %v618 = vrot.slane %v394, %v617
        %v620 = vunpack.c.l.s4 839922192
        %v621 = vunpack.c.0.s8 %v620
        %v622 = vlaneseq
        %v623 = vshrl.u32 %v622, 7
        %v624 = vsub.s32 %v621, %v623
        %v625 = vrot.slane %v404, %v624
        %v627 = vunpack.c.l.s4 1985246804
        %v628 = vunpack.c.0.s8 %v627
        %v629 = vlaneseq
        %v630 = vshrl.u32 %v629, 7
        %v631 = vsub.s32 %v628, %v630
        %v632 = vrot.slane %v404, %v631
        %v634 = vunpack.c.l.s4 839922192
        %v635 = vunpack.c.0.s8 %v634
        %v636 = vlaneseq
        %v637 = vshrl.u32 %v636, 7
        %v638 = vsub.s32 %v635, %v637
        %v639 = vrot.slane %v408, %v638
        %v641 = vunpack.c.l.s4 1985246804
        %v642 = vunpack.c.0.s8 %v641
        %v643 = vlaneseq
        %v644 = vshrl.u32 %v643, 7
        %v645 = vsub.s32 %v642, %v644
        %v646 = vrot.slane %v408, %v645
        %v648 = vunpack.c.l.s4 839922192
        %v649 = vunpack.c.0.s8 %v648
        %v650 = vlaneseq
        %v651 = vshrl.u32 %v650, 7
        %v652 = vsub.s32 %v649, %v651
        %v653 = vrot.slane %v412, %v652
        %v655 = vunpack.c.l.s4 1985246804
        %v656 = vunpack.c.0.s8 %v655
        %v657 = vlaneseq
        %v658 = vshrl.u32 %v657, 7
        %v659 = vsub.s32 %v656, %v658
        %v660 = vrot.slane %v412, %v659
        %v662 = vunpack.c.l.s4 839922192
        %v663 = vunpack.c.0.s8 %v662
        %v664 = vlaneseq
        %v665 = vshrl.u32 %v664, 7
        %v666 = vsub.s32 %v663, %v665
        %v667 = vrot.slane %v416, %v666
        %v669 = vunpack.c.l.s4 1985246804
        %v670 = vunpack.c.0.s8 %v669
        %v671 = vlaneseq
        %v672 = vshrl.u32 %v671, 7
        %v673 = vsub.s32 %v670, %v672
        %v674 = vrot.slane %v416, %v673
        %v676 = vunpack.c.l.s4 839922192
        %v677 = vunpack.c.0.s8 %v676
        %v678 = vlaneseq
        %v679 = vshrl.u32 %v678, 7
        %v680 = vsub.s32 %v677, %v679
        %v681 = vrot.slane %v423, %v680
        %v683 = vunpack.c.l.s4 1985246804
        %v684 = vunpack.c.0.s8 %v683
        %v685 = vlaneseq
        %v686 = vshrl.u32 %v685, 7
        %v687 = vsub.s32 %v684, %v686
        %v688 = vrot.slane %v423, %v687
        %v690 = vunpack.c.l.s4 839922192
        %v691 = vunpack.c.0.s8 %v690
        %v692 = vlaneseq
        %v693 = vshrl.u32 %v692, 7
        %v694 = vsub.s32 %v691, %v693
        %v695 = vrot.slane %v427, %v694
        %v697 = vunpack.c.l.s4 1985246804
        %v698 = vunpack.c.0.s8 %v697
        %v699 = vlaneseq
        %v700 = vshrl.u32 %v699, 7
        %v701 = vsub.s32 %v698, %v700
        %v702 = vrot.slane %v427, %v701
        %v704 = vunpack.c.l.s4 839922192
        %v705 = vunpack.c.0.s8 %v704
        %v706 = vlaneseq
        %v707 = vshrl.u32 %v706, 7
        %v708 = vsub.s32 %v705, %v707
        %v709 = vrot.slane %v431, %v708
        %v711 = vunpack.c.l.s4 1985246804
        %v712 = vunpack.c.0.s8 %v711
        %v713 = vlaneseq
        %v714 = vshrl.u32 %v713, 7
        %v715 = vsub.s32 %v712, %v714
        %v716 = vrot.slane %v431, %v715
        %v718 = vunpack.c.l.s4 839922192
        %v719 = vunpack.c.0.s8 %v718
        %v720 = vlaneseq
        %v721 = vshrl.u32 %v720, 7
        %v722 = vsub.s32 %v719, %v721
        %v723 = vrot.slane %v435, %v722
        %v725 = vunpack.c.l.s4 1985246804
        %v726 = vunpack.c.0.s8 %v725
        %v727 = vlaneseq
        %v728 = vshrl.u32 %v727, 7
        %v729 = vsub.s32 %v726, %v728
        %v730 = vrot.slane %v435, %v729
        %v732 = vunpack.c.l.s4 839922192
        %v733 = vunpack.c.0.s8 %v732
        %v734 = vlaneseq
        %v735 = vshrl.u32 %v734, 7
        %v736 = vsub.s32 %v733, %v735
        %v737 = vrot.slane %v442, %v736
        %v739 = vunpack.c.l.s4 1985246804
        %v740 = vunpack.c.0.s8 %v739
        %v741 = vlaneseq
        %v742 = vshrl.u32 %v741, 7
        %v743 = vsub.s32 %v740, %v742
        %v744 = vrot.slane %v442, %v743
        %v746 = vunpack.c.l.s4 839922192
        %v747 = vunpack.c.0.s8 %v746
        %v748 = vlaneseq
        %v749 = vshrl.u32 %v748, 7
        %v750 = vsub.s32 %v747, %v749
        %v751 = vrot.slane %v446, %v750
        %v753 = vunpack.c.l.s4 1985246804
        %v754 = vunpack.c.0.s8 %v753
        %v755 = vlaneseq
        %v756 = vshrl.u32 %v755, 7
        %v757 = vsub.s32 %v754, %v756
        %v758 = vrot.slane %v446, %v757
        %v760 = vunpack.c.l.s4 839922192
        %v761 = vunpack.c.0.s8 %v760
        %v762 = vlaneseq
        %v763 = vshrl.u32 %v762, 7
        %v764 = vsub.s32 %v761, %v763
        %v765 = vrot.slane %v450, %v764
        %v767 = vunpack.c.l.s4 1985246804
        %v768 = vunpack.c.0.s8 %v767
        %v769 = vlaneseq
        %v770 = vshrl.u32 %v769, 7
        %v771 = vsub.s32 %v768, %v770
        %v772 = vrot.slane %v450, %v771
        %v774 = vunpack.c.l.s4 839922192
        %v775 = vunpack.c.0.s8 %v774
        %v776 = vlaneseq
        %v777 = vshrl.u32 %v776, 7
        %v778 = vsub.s32 %v775, %v777
        %v779 = vrot.slane %v454, %v778
        %v781 = vunpack.c.l.s4 1985246804
        %v782 = vunpack.c.0.s8 %v781
        %v783 = vlaneseq
        %v784 = vshrl.u32 %v783, 7
        %v785 = vsub.s32 %v782, %v784
        %v786 = vrot.slane %v454, %v785
        %v788 = vunpack.c.l.s4 839922192
        %v789 = vunpack.c.0.s8 %v788
        %v790 = vlaneseq
        %v791 = vshrl.u32 %v790, 7
        %v792 = vsub.s32 %v789, %v791
        %v793 = vrot.slane %v461, %v792
        %v795 = vunpack.c.l.s4 1985246804
        %v796 = vunpack.c.0.s8 %v795
        %v797 = vlaneseq
        %v798 = vshrl.u32 %v797, 7
        %v799 = vsub.s32 %v796, %v798
        %v800 = vrot.slane %v461, %v799
        %v802 = vunpack.c.l.s4 839922192
        %v803 = vunpack.c.0.s8 %v802
        %v804 = vlaneseq
        %v805 = vshrl.u32 %v804, 7
        %v806 = vsub.s32 %v803, %v805
        %v807 = vrot.slane %v465, %v806
        %v809 = vunpack.c.l.s4 1985246804
        %v810 = vunpack.c.0.s8 %v809
        %v811 = vlaneseq
        %v812 = vshrl.u32 %v811, 7
        %v813 = vsub.s32 %v810, %v812
        %v814 = vrot.slane %v465, %v813
        %v816 = vunpack.c.l.s4 839922192
        %v817 = vunpack.c.0.s8 %v816
        %v818 = vlaneseq
        %v819 = vshrl.u32 %v818, 7
        %v820 = vsub.s32 %v817, %v819
        %v821 = vrot.slane %v469, %v820
        %v823 = vunpack.c.l.s4 1985246804
        %v824 = vunpack.c.0.s8 %v823
        %v825 = vlaneseq
        %v826 = vshrl.u32 %v825, 7
        %v827 = vsub.s32 %v824, %v826
        %v828 = vrot.slane %v469, %v827
        %v830 = vunpack.c.l.s4 839922192
        %v831 = vunpack.c.0.s8 %v830
        %v832 = vlaneseq
        %v833 = vshrl.u32 %v832, 7
        %v834 = vsub.s32 %v831, %v833
        %v835 = vrot.slane %v473, %v834
        %v837 = vunpack.c.l.s4 1985246804
        %v838 = vunpack.c.0.s8 %v837
        %v839 = vlaneseq
        %v840 = vshrl.u32 %v839, 7
        %v841 = vsub.s32 %v838, %v840
        %v842 = vrot.slane %v473, %v841
        %v844 = vunpack.c.l.s4 839922192
        %v845 = vunpack.c.0.s8 %v844
        %v846 = vlaneseq
        %v847 = vshrl.u32 %v846, 7
        %v848 = vsub.s32 %v845, %v847
        %v849 = vrot.slane %v480, %v848
        %v851 = vunpack.c.l.s4 1985246804
        %v852 = vunpack.c.0.s8 %v851
        %v853 = vlaneseq
        %v854 = vshrl.u32 %v853, 7
        %v855 = vsub.s32 %v852, %v854
        %v856 = vrot.slane %v480, %v855
        %v858 = vunpack.c.l.s4 839922192
        %v859 = vunpack.c.0.s8 %v858
        %v860 = vlaneseq
        %v861 = vshrl.u32 %v860, 7
        %v862 = vsub.s32 %v859, %v861
        %v863 = vrot.slane %v484, %v862
        %v865 = vunpack.c.l.s4 1985246804
        %v866 = vunpack.c.0.s8 %v865
        %v867 = vlaneseq
        %v868 = vshrl.u32 %v867, 7
        %v869 = vsub.s32 %v866, %v868
        %v870 = vrot.slane %v484, %v869
        %v872 = vunpack.c.l.s4 839922192
        %v873 = vunpack.c.0.s8 %v872
        %v874 = vlaneseq
        %v875 = vshrl.u32 %v874, 7
        %v876 = vsub.s32 %v873, %v875
        %v877 = vrot.slane %v488, %v876
        %v879 = vunpack.c.l.s4 1985246804
        %v880 = vunpack.c.0.s8 %v879
        %v881 = vlaneseq
        %v882 = vshrl.u32 %v881, 7
        %v883 = vsub.s32 %v880, %v882
        %v884 = vrot.slane %v488, %v883
        %v886 = vunpack.c.l.s4 839922192
        %v887 = vunpack.c.0.s8 %v886
        %v888 = vlaneseq
        %v889 = vshrl.u32 %v888, 7
        %v890 = vsub.s32 %v887, %v889
        %v891 = vrot.slane %v492, %v890
        %v893 = vunpack.c.l.s4 1985246804
        %v894 = vunpack.c.0.s8 %v893
        %v895 = vlaneseq
        %v896 = vshrl.u32 %v895, 7
        %v897 = vsub.s32 %v894, %v896
        %v898 = vrot.slane %v492, %v897
        %v900 = vunpack.c.l.s4 839922192
        %v901 = vunpack.c.0.s8 %v900
        %v902 = vlaneseq
        %v903 = vshrl.u32 %v902, 7
        %v904 = vsub.s32 %v901, %v903
        %v905 = vrot.slane %v499, %v904
        %v907 = vunpack.c.l.s4 1985246804
        %v908 = vunpack.c.0.s8 %v907
        %v909 = vlaneseq
        %v910 = vshrl.u32 %v909, 7
        %v911 = vsub.s32 %v908, %v910
        %v912 = vrot.slane %v499, %v911
        %v914 = vunpack.c.l.s4 839922192
        %v915 = vunpack.c.0.s8 %v914
        %v916 = vlaneseq
        %v917 = vshrl.u32 %v916, 7
        %v918 = vsub.s32 %v915, %v917
        %v919 = vrot.slane %v503, %v918
        %v921 = vunpack.c.l.s4 1985246804
        %v922 = vunpack.c.0.s8 %v921
        %v923 = vlaneseq
        %v924 = vshrl.u32 %v923, 7
        %v925 = vsub.s32 %v922, %v924
        %v926 = vrot.slane %v503, %v925
        %v928 = vunpack.c.l.s4 839922192
        %v929 = vunpack.c.0.s8 %v928
        %v930 = vlaneseq
        %v931 = vshrl.u32 %v930, 7
        %v932 = vsub.s32 %v929, %v931
        %v933 = vrot.slane %v507, %v932
        %v935 = vunpack.c.l.s4 1985246804
        %v936 = vunpack.c.0.s8 %v935
        %v937 = vlaneseq
        %v938 = vshrl.u32 %v937, 7
        %v939 = vsub.s32 %v936, %v938
        %v940 = vrot.slane %v507, %v939
        %v942 = vunpack.c.l.s4 839922192
        %v943 = vunpack.c.0.s8 %v942
        %v944 = vlaneseq
        %v945 = vshrl.u32 %v944, 7
        %v946 = vsub.s32 %v943, %v945
        %v947 = vrot.slane %v511, %v946
        %v949 = vunpack.c.l.s4 1985246804
        %v950 = vunpack.c.0.s8 %v949
        %v951 = vlaneseq
        %v952 = vshrl.u32 %v951, 7
        %v953 = vsub.s32 %v950, %v952
        %v954 = vrot.slane %v511, %v953
        %v956 = vunpack.c.l.s4 839922192
        %v957 = vunpack.c.0.s8 %v956
        %v958 = vlaneseq
        %v959 = vshrl.u32 %v958, 7
        %v960 = vsub.s32 %v957, %v959
        %v961 = vrot.slane %v518, %v960
        %v963 = vunpack.c.l.s4 1985246804
        %v964 = vunpack.c.0.s8 %v963
        %v965 = vlaneseq
        %v966 = vshrl.u32 %v965, 7
        %v967 = vsub.s32 %v964, %v966
        %v968 = vrot.slane %v518, %v967
        %v970 = vunpack.c.l.s4 839922192
        %v971 = vunpack.c.0.s8 %v970
        %v972 = vlaneseq
        %v973 = vshrl.u32 %v972, 7
        %v974 = vsub.s32 %v971, %v973
        %v975 = vrot.slane %v522, %v974
        %v977 = vunpack.c.l.s4 1985246804
        %v978 = vunpack.c.0.s8 %v977
        %v979 = vlaneseq
        %v980 = vshrl.u32 %v979, 7
        %v981 = vsub.s32 %v978, %v980
        %v982 = vrot.slane %v522, %v981
        %v984 = vunpack.c.l.s4 839922192
        %v985 = vunpack.c.0.s8 %v984
        %v986 = vlaneseq
        %v987 = vshrl.u32 %v986, 7
        %v988 = vsub.s32 %v985, %v987
        %v989 = vrot.slane %v526, %v988
        %v991 = vunpack.c.l.s4 1985246804
        %v992 = vunpack.c.0.s8 %v991
        %v993 = vlaneseq
        %v994 = vshrl.u32 %v993, 7
        %v995 = vsub.s32 %v992, %v994
        %v996 = vrot.slane %v526, %v995
        %v998 = vunpack.c.l.s4 839922192
        %v999 = vunpack.c.0.s8 %v998
        %v1000 = vlaneseq
        %v1001 = vshrl.u32 %v1000, 7
        %v1002 = vsub.s32 %v999, %v1001
        %v1003 = vrot.slane %v530, %v1002
        %v1005 = vunpack.c.l.s4 1985246804
        %v1006 = vunpack.c.0.s8 %v1005
        %v1007 = vlaneseq
        %v1008 = vshrl.u32 %v1007, 7
        %v1009 = vsub.s32 %v1006, %v1008
        %v1010 = vrot.slane %v530, %v1009
        %v1075 = vmul.bf16 %v243, %v569
        %v1076 = vmul.bf16 %v244, %v576
        %v1077 = vmul.bf16 %v245, %v583
        %v1078 = vmul.bf16 %v246, %v590
        %v1079 = vmul.bf16 %v247, %v597
        %v1080 = vmul.bf16 %v248, %v604
        %v1081 = vmul.bf16 %v249, %v611
        %v1082 = vmul.bf16 %v250, %v618
        %v1083 = vmul.bf16 %v259, %v625
        %v1084 = vmul.bf16 %v260, %v632
        %v1085 = vmul.bf16 %v261, %v639
        %v1086 = vmul.bf16 %v262, %v646
        %v1087 = vmul.bf16 %v263, %v653
        %v1088 = vmul.bf16 %v264, %v660
        %v1089 = vmul.bf16 %v265, %v667
        %v1090 = vmul.bf16 %v266, %v674
        %v1091 = vmul.bf16 %v275, %v681
        %v1092 = vmul.bf16 %v276, %v688
        %v1093 = vmul.bf16 %v277, %v695
        %v1094 = vmul.bf16 %v278, %v702
        %v1095 = vmul.bf16 %v279, %v709
        %v1096 = vmul.bf16 %v280, %v716
        %v1097 = vmul.bf16 %v281, %v723
        %v1098 = vmul.bf16 %v282, %v730
        %v1099 = vmul.bf16 %v291, %v737
        %v1100 = vmul.bf16 %v292, %v744
        %v1101 = vmul.bf16 %v293, %v751
        %v1102 = vmul.bf16 %v294, %v758
        %v1103 = vmul.bf16 %v295, %v765
        %v1104 = vmul.bf16 %v296, %v772
        %v1105 = vmul.bf16 %v297, %v779
        %v1106 = vmul.bf16 %v298, %v786
        %v1107 = vmul.bf16 %v307, %v793
        %v1108 = vmul.bf16 %v308, %v800
        %v1109 = vmul.bf16 %v309, %v807
        %v1110 = vmul.bf16 %v310, %v814
        %v1111 = vmul.bf16 %v311, %v821
        %v1112 = vmul.bf16 %v312, %v828
        %v1113 = vmul.bf16 %v313, %v835
        %v1114 = vmul.bf16 %v314, %v842
        %v1115 = vmul.bf16 %v323, %v849
        %v1116 = vmul.bf16 %v324, %v856
        %v1117 = vmul.bf16 %v325, %v863
        %v1118 = vmul.bf16 %v326, %v870
        %v1119 = vmul.bf16 %v327, %v877
        %v1120 = vmul.bf16 %v328, %v884
        %v1121 = vmul.bf16 %v329, %v891
        %v1122 = vmul.bf16 %v330, %v898
        %v1123 = vmul.bf16 %v339, %v905
        %v1124 = vmul.bf16 %v340, %v912
        %v1125 = vmul.bf16 %v341, %v919
        %v1126 = vmul.bf16 %v342, %v926
        %v1127 = vmul.bf16 %v343, %v933
        %v1128 = vmul.bf16 %v344, %v940
        %v1129 = vmul.bf16 %v345, %v947
        %v1130 = vmul.bf16 %v346, %v954
        %v1131 = vmul.bf16 %v355, %v961
        %v1132 = vmul.bf16 %v356, %v968
        %v1133 = vmul.bf16 %v357, %v975
        %v1134 = vmul.bf16 %v358, %v982
        %v1135 = vmul.bf16 %v359, %v989
        %v1136 = vmul.bf16 %v360, %v996
        %v1137 = vmul.bf16 %v361, %v1003
        %v1138 = vmul.bf16 %v362, %v1010
        %v1139 = vunpack.c.l.bf16 %v1075
        %v1140 = vunpack.c.l.bf16 %v1076
        %v1141 = vunpack.c.l.bf16 %v1077
        %v1142 = vunpack.c.l.bf16 %v1078
        %v1143 = vunpack.c.l.bf16 %v1079
        %v1144 = vunpack.c.l.bf16 %v1080
        %v1145 = vunpack.c.l.bf16 %v1081
        %v1146 = vunpack.c.l.bf16 %v1082
        %v1147 = vunpack.c.l.bf16 %v1083
        %v1148 = vunpack.c.l.bf16 %v1084
        %v1149 = vunpack.c.l.bf16 %v1085
        %v1150 = vunpack.c.l.bf16 %v1086
        %v1151 = vunpack.c.l.bf16 %v1087
        %v1152 = vunpack.c.l.bf16 %v1088
        %v1153 = vunpack.c.l.bf16 %v1089
        %v1154 = vunpack.c.l.bf16 %v1090
        %v1155 = vunpack.c.l.bf16 %v1091
        %v1156 = vunpack.c.l.bf16 %v1092
        %v1157 = vunpack.c.l.bf16 %v1093
        %v1158 = vunpack.c.l.bf16 %v1094
        %v1159 = vunpack.c.l.bf16 %v1095
        %v1160 = vunpack.c.l.bf16 %v1096
        %v1161 = vunpack.c.l.bf16 %v1097
        %v1162 = vunpack.c.l.bf16 %v1098
        %v1163 = vunpack.c.l.bf16 %v1099
        %v1164 = vunpack.c.l.bf16 %v1100
        %v1165 = vunpack.c.l.bf16 %v1101
        %v1166 = vunpack.c.l.bf16 %v1102
        %v1167 = vunpack.c.l.bf16 %v1103
        %v1168 = vunpack.c.l.bf16 %v1104
        %v1169 = vunpack.c.l.bf16 %v1105
        %v1170 = vunpack.c.l.bf16 %v1106
        %v1171 = vunpack.c.l.bf16 %v1107
        %v1172 = vunpack.c.l.bf16 %v1108
        %v1173 = vunpack.c.l.bf16 %v1109
        %v1174 = vunpack.c.l.bf16 %v1110
        %v1175 = vunpack.c.l.bf16 %v1111
        %v1176 = vunpack.c.l.bf16 %v1112
        %v1177 = vunpack.c.l.bf16 %v1113
        %v1178 = vunpack.c.l.bf16 %v1114
        %v1179 = vunpack.c.l.bf16 %v1115
        %v1180 = vunpack.c.l.bf16 %v1116
        %v1181 = vunpack.c.l.bf16 %v1117
        %v1182 = vunpack.c.l.bf16 %v1118
        %v1183 = vunpack.c.l.bf16 %v1119
        %v1184 = vunpack.c.l.bf16 %v1120
        %v1185 = vunpack.c.l.bf16 %v1121
        %v1186 = vunpack.c.l.bf16 %v1122
        %v1187 = vunpack.c.l.bf16 %v1123
        %v1188 = vunpack.c.l.bf16 %v1124
        %v1189 = vunpack.c.l.bf16 %v1125
        %v1190 = vunpack.c.l.bf16 %v1126
        %v1191 = vunpack.c.l.bf16 %v1127
        %v1192 = vunpack.c.l.bf16 %v1128
        %v1193 = vunpack.c.l.bf16 %v1129
        %v1194 = vunpack.c.l.bf16 %v1130
        %v1195 = vunpack.c.l.bf16 %v1131
        %v1196 = vunpack.c.l.bf16 %v1132
        %v1197 = vunpack.c.l.bf16 %v1133
        %v1198 = vunpack.c.l.bf16 %v1134
        %v1199 = vunpack.c.l.bf16 %v1135
        %v1200 = vunpack.c.l.bf16 %v1136
        %v1201 = vunpack.c.l.bf16 %v1137
        %v1202 = vunpack.c.l.bf16 %v1138
        %v1203 = vadd.f32 %v1139, %v1140
        %v1204 = vadd.f32 %v1203, %v1141
        %v1205 = vadd.f32 %v1204, %v1142
        %v1206 = vadd.f32 %v1205, %v1143
        %v1207 = vadd.f32 %v1206, %v1144
        %v1208 = vadd.f32 %v1207, %v1145
        %v1209 = vadd.f32 %v1208, %v1146
        %v1210 = vrot.slane %v1209, 4
        %v1211 = vadd.f32 %v1209, %v1210
        %v1212 = vrot.slane %v1211, 2
        %v1213 = vadd.f32 %v1211, %v1212
        %v1214 = vrot.slane %v1213, 1
        %v1215 = vadd.f32 %v1213, %v1214
        %v1216 = vadd.f32 %v1147, %v1148
        %v1217 = vadd.f32 %v1216, %v1149
        %v1218 = vadd.f32 %v1217, %v1150
        %v1219 = vadd.f32 %v1218, %v1151
        %v1220 = vadd.f32 %v1219, %v1152
        %v1221 = vadd.f32 %v1220, %v1153
        %v1222 = vadd.f32 %v1221, %v1154
        %v1223 = vrot.slane %v1222, 4
        %v1224 = vadd.f32 %v1222, %v1223
        %v1225 = vrot.slane %v1224, 2
        %v1226 = vadd.f32 %v1224, %v1225
        %v1227 = vrot.slane %v1226, 1
        %v1228 = vadd.f32 %v1226, %v1227
        %v1229 = vadd.f32 %v1155, %v1156
        %v1230 = vadd.f32 %v1229, %v1157
        %v1231 = vadd.f32 %v1230, %v1158
        %v1232 = vadd.f32 %v1231, %v1159
        %v1233 = vadd.f32 %v1232, %v1160
        %v1234 = vadd.f32 %v1233, %v1161
        %v1235 = vadd.f32 %v1234, %v1162
        %v1236 = vrot.slane %v1235, 4
        %v1237 = vadd.f32 %v1235, %v1236
        %v1238 = vrot.slane %v1237, 2
        %v1239 = vadd.f32 %v1237, %v1238
        %v1240 = vrot.slane %v1239, 1
        %v1241 = vadd.f32 %v1239, %v1240
        %v1242 = vadd.f32 %v1163, %v1164
        %v1243 = vadd.f32 %v1242, %v1165
        %v1244 = vadd.f32 %v1243, %v1166
        %v1245 = vadd.f32 %v1244, %v1167
        %v1246 = vadd.f32 %v1245, %v1168
        %v1247 = vadd.f32 %v1246, %v1169
        %v1248 = vadd.f32 %v1247, %v1170
        %v1249 = vrot.slane %v1248, 4
        %v1250 = vadd.f32 %v1248, %v1249
        %v1251 = vrot.slane %v1250, 2
        %v1252 = vadd.f32 %v1250, %v1251
        %v1253 = vrot.slane %v1252, 1
        %v1254 = vadd.f32 %v1252, %v1253
        %v1255 = vadd.f32 %v1171, %v1172
        %v1256 = vadd.f32 %v1255, %v1173
        %v1257 = vadd.f32 %v1256, %v1174
        %v1258 = vadd.f32 %v1257, %v1175
        %v1259 = vadd.f32 %v1258, %v1176
        %v1260 = vadd.f32 %v1259, %v1177
        %v1261 = vadd.f32 %v1260, %v1178
        %v1262 = vrot.slane %v1261, 4
        %v1263 = vadd.f32 %v1261, %v1262
        %v1264 = vrot.slane %v1263, 2
        %v1265 = vadd.f32 %v1263, %v1264
        %v1266 = vrot.slane %v1265, 1
        %v1267 = vadd.f32 %v1265, %v1266
        %v1268 = vadd.f32 %v1179, %v1180
        %v1269 = vadd.f32 %v1268, %v1181
        %v1270 = vadd.f32 %v1269, %v1182
        %v1271 = vadd.f32 %v1270, %v1183
        %v1272 = vadd.f32 %v1271, %v1184
        %v1273 = vadd.f32 %v1272, %v1185
        %v1274 = vadd.f32 %v1273, %v1186
        %v1275 = vrot.slane %v1274, 4
        %v1276 = vadd.f32 %v1274, %v1275
        %v1277 = vrot.slane %v1276, 2
        %v1278 = vadd.f32 %v1276, %v1277
        %v1279 = vrot.slane %v1278, 1
        %v1280 = vadd.f32 %v1278, %v1279
        %v1281 = vadd.f32 %v1187, %v1188
        %v1282 = vadd.f32 %v1281, %v1189
        %v1283 = vadd.f32 %v1282, %v1190
        %v1284 = vadd.f32 %v1283, %v1191
        %v1285 = vadd.f32 %v1284, %v1192
        %v1286 = vadd.f32 %v1285, %v1193
        %v1287 = vadd.f32 %v1286, %v1194
        %v1288 = vrot.slane %v1287, 4
        %v1289 = vadd.f32 %v1287, %v1288
        %v1290 = vrot.slane %v1289, 2
        %v1291 = vadd.f32 %v1289, %v1290
        %v1292 = vrot.slane %v1291, 1
        %v1293 = vadd.f32 %v1291, %v1292
        %v1294 = vadd.f32 %v1195, %v1196
        %v1295 = vadd.f32 %v1294, %v1197
        %v1296 = vadd.f32 %v1295, %v1198
        %v1297 = vadd.f32 %v1296, %v1199
        %v1298 = vadd.f32 %v1297, %v1200
        %v1299 = vadd.f32 %v1298, %v1201
        %v1300 = vadd.f32 %v1299, %v1202
        %v1301 = vrot.slane %v1300, 4
        %v1302 = vadd.f32 %v1300, %v1301
        %v1303 = vrot.slane %v1302, 2
        %v1304 = vadd.f32 %v1302, %v1303
        %v1305 = vrot.slane %v1304, 1
        %v1306 = vadd.f32 %v1304, %v1305
        %v1307 = vadd.f32 %v1215, 0.0
        %v1308 = vadd.f32 %v1228, 0.0
        %v1309 = vadd.f32 %v1241, 0.0
        %v1310 = vadd.f32 %v1254, 0.0
        %v1311 = vadd.f32 %v1267, 0.0
        %v1312 = vadd.f32 %v1280, 0.0
        %v1313 = vadd.f32 %v1293, 0.0
        %v1314 = vadd.f32 %v1306, 0.0
        %s1316 = sor.u32 256, 64
        %1317 = vbcast.lane.c.b16.xlu0 %v379, %s1316
        %v1318 = vpop.permute.xlu0 %1317
        %s1320 = sor.u32 256, 80
        %1321 = vbcast.lane.c.b16.xlu0 %v379, %s1320
        %v1322 = vpop.permute.xlu0 %1321
        %s1324 = sor.u32 256, 96
        %1325 = vbcast.lane.c.b16.xlu0 %v379, %s1324
        %v1326 = vpop.permute.xlu0 %1325
        %s1328 = sor.u32 256, 112
        %1329 = vbcast.lane.c.b16.xlu0 %v379, %s1328
        %v1330 = vpop.permute.xlu0 %1329
        %s1332 = sor.u32 256, 64
        %1333 = vbcast.lane.c.b16.xlu0 %v401, %s1332
        %v1334 = vpop.permute.xlu0 %1333
        %s1336 = sor.u32 256, 80
        %1337 = vbcast.lane.c.b16.xlu0 %v401, %s1336
        %v1338 = vpop.permute.xlu0 %1337
        %s1340 = sor.u32 256, 96
        %1341 = vbcast.lane.c.b16.xlu0 %v401, %s1340
        %v1342 = vpop.permute.xlu0 %1341
        %s1344 = sor.u32 256, 112
        %1345 = vbcast.lane.c.b16.xlu0 %v401, %s1344
        %v1346 = vpop.permute.xlu0 %1345
        %s1348 = sor.u32 256, 64
        %1349 = vbcast.lane.c.b16.xlu0 %v420, %s1348
        %v1350 = vpop.permute.xlu0 %1349
        %s1352 = sor.u32 256, 80
        %1353 = vbcast.lane.c.b16.xlu0 %v420, %s1352
        %v1354 = vpop.permute.xlu0 %1353
        %s1356 = sor.u32 256, 96
        %1357 = vbcast.lane.c.b16.xlu0 %v420, %s1356
        %v1358 = vpop.permute.xlu0 %1357
        %s1360 = sor.u32 256, 112
        %1361 = vbcast.lane.c.b16.xlu0 %v420, %s1360
        %v1362 = vpop.permute.xlu0 %1361
        %s1364 = sor.u32 256, 64
        %1365 = vbcast.lane.c.b16.xlu0 %v439, %s1364
        %v1366 = vpop.permute.xlu0 %1365
        %s1368 = sor.u32 256, 80
        %1369 = vbcast.lane.c.b16.xlu0 %v439, %s1368
        %v1370 = vpop.permute.xlu0 %1369
        %s1372 = sor.u32 256, 96
        %1373 = vbcast.lane.c.b16.xlu0 %v439, %s1372
        %v1374 = vpop.permute.xlu0 %1373
        %s1376 = sor.u32 256, 112
        %1377 = vbcast.lane.c.b16.xlu0 %v439, %s1376
        %v1378 = vpop.permute.xlu0 %1377
        %s1380 = sor.u32 256, 64
        %1381 = vbcast.lane.c.b16.xlu0 %v458, %s1380
        %v1382 = vpop.permute.xlu0 %1381
        %s1384 = sor.u32 256, 80
        %1385 = vbcast.lane.c.b16.xlu0 %v458, %s1384
        %v1386 = vpop.permute.xlu0 %1385
        %s1388 = sor.u32 256, 96
        %1389 = vbcast.lane.c.b16.xlu0 %v458, %s1388
        %v1390 = vpop.permute.xlu0 %1389
        %s1392 = sor.u32 256, 112
        %1393 = vbcast.lane.c.b16.xlu0 %v458, %s1392
        %v1394 = vpop.permute.xlu0 %1393
        %s1396 = sor.u32 256, 64
        %1397 = vbcast.lane.c.b16.xlu0 %v477, %s1396
        %v1398 = vpop.permute.xlu0 %1397
        %s1400 = sor.u32 256, 80
        %1401 = vbcast.lane.c.b16.xlu0 %v477, %s1400
        %v1402 = vpop.permute.xlu0 %1401
        %s1404 = sor.u32 256, 96
        %1405 = vbcast.lane.c.b16.xlu0 %v477, %s1404
        %v1406 = vpop.permute.xlu0 %1405
        %s1408 = sor.u32 256, 112
        %1409 = vbcast.lane.c.b16.xlu0 %v477, %s1408
        %v1410 = vpop.permute.xlu0 %1409
        %s1412 = sor.u32 256, 64
        %1413 = vbcast.lane.c.b16.xlu0 %v496, %s1412
        %v1414 = vpop.permute.xlu0 %1413
        %s1416 = sor.u32 256, 80
        %1417 = vbcast.lane.c.b16.xlu0 %v496, %s1416
        %v1418 = vpop.permute.xlu0 %1417
        %s1420 = sor.u32 256, 96
        %1421 = vbcast.lane.c.b16.xlu0 %v496, %s1420
        %v1422 = vpop.permute.xlu0 %1421
        %s1424 = sor.u32 256, 112
        %1425 = vbcast.lane.c.b16.xlu0 %v496, %s1424
        %v1426 = vpop.permute.xlu0 %1425
        %s1428 = sor.u32 256, 64
        %1429 = vbcast.lane.c.b16.xlu0 %v515, %s1428
        %v1430 = vpop.permute.xlu0 %1429
        %s1432 = sor.u32 256, 80
        %1433 = vbcast.lane.c.b16.xlu0 %v515, %s1432
        %v1434 = vpop.permute.xlu0 %1433
        %s1436 = sor.u32 256, 96
        %1437 = vbcast.lane.c.b16.xlu0 %v515, %s1436
        %v1438 = vpop.permute.xlu0 %1437
        %s1440 = sor.u32 256, 112
        %1441 = vbcast.lane.c.b16.xlu0 %v515, %s1440
        %v1442 = vpop.permute.xlu0 %1441
        %v1476 = vunpack.c.l.s4 839922192
        %v1477 = vunpack.c.0.s8 %v1476
        %v1478 = vlaneseq
        %v1479 = vshrl.u32 %v1478, 7
        %v1480 = vsub.s32 %v1477, %v1479
        %v1481 = vrot.slane %v1318, %v1480
        %v1483 = vunpack.c.l.s4 1985246804
        %v1484 = vunpack.c.0.s8 %v1483
        %v1485 = vlaneseq
        %v1486 = vshrl.u32 %v1485, 7
        %v1487 = vsub.s32 %v1484, %v1486
        %v1488 = vrot.slane %v1318, %v1487
        %v1490 = vunpack.c.l.s4 839922192
        %v1491 = vunpack.c.0.s8 %v1490
        %v1492 = vlaneseq
        %v1493 = vshrl.u32 %v1492, 7
        %v1494 = vsub.s32 %v1491, %v1493
        %v1495 = vrot.slane %v1322, %v1494
        %v1497 = vunpack.c.l.s4 1985246804
        %v1498 = vunpack.c.0.s8 %v1497
        %v1499 = vlaneseq
        %v1500 = vshrl.u32 %v1499, 7
        %v1501 = vsub.s32 %v1498, %v1500
        %v1502 = vrot.slane %v1322, %v1501
        %v1504 = vunpack.c.l.s4 839922192
        %v1505 = vunpack.c.0.s8 %v1504
        %v1506 = vlaneseq
        %v1507 = vshrl.u32 %v1506, 7
        %v1508 = vsub.s32 %v1505, %v1507
        %v1509 = vrot.slane %v1326, %v1508
        %v1511 = vunpack.c.l.s4 1985246804
        %v1512 = vunpack.c.0.s8 %v1511
        %v1513 = vlaneseq
        %v1514 = vshrl.u32 %v1513, 7
        %v1515 = vsub.s32 %v1512, %v1514
        %v1516 = vrot.slane %v1326, %v1515
        %v1518 = vunpack.c.l.s4 839922192
        %v1519 = vunpack.c.0.s8 %v1518
        %v1520 = vlaneseq
        %v1521 = vshrl.u32 %v1520, 7
        %v1522 = vsub.s32 %v1519, %v1521
        %v1523 = vrot.slane %v1330, %v1522
        %v1525 = vunpack.c.l.s4 1985246804
        %v1526 = vunpack.c.0.s8 %v1525
        %v1527 = vlaneseq
        %v1528 = vshrl.u32 %v1527, 7
        %v1529 = vsub.s32 %v1526, %v1528
        %v1530 = vrot.slane %v1330, %v1529
        %v1532 = vunpack.c.l.s4 839922192
        %v1533 = vunpack.c.0.s8 %v1532
        %v1534 = vlaneseq
        %v1535 = vshrl.u32 %v1534, 7
        %v1536 = vsub.s32 %v1533, %v1535
        %v1537 = vrot.slane %v1334, %v1536
        %v1539 = vunpack.c.l.s4 1985246804
        %v1540 = vunpack.c.0.s8 %v1539
        %v1541 = vlaneseq
        %v1542 = vshrl.u32 %v1541, 7
        %v1543 = vsub.s32 %v1540, %v1542
        %v1544 = vrot.slane %v1334, %v1543
        %v1546 = vunpack.c.l.s4 839922192
        %v1547 = vunpack.c.0.s8 %v1546
        %v1548 = vlaneseq
        %v1549 = vshrl.u32 %v1548, 7
        %v1550 = vsub.s32 %v1547, %v1549
        %v1551 = vrot.slane %v1338, %v1550
        %v1553 = vunpack.c.l.s4 1985246804
        %v1554 = vunpack.c.0.s8 %v1553
        %v1555 = vlaneseq
        %v1556 = vshrl.u32 %v1555, 7
        %v1557 = vsub.s32 %v1554, %v1556
        %v1558 = vrot.slane %v1338, %v1557
        %v1560 = vunpack.c.l.s4 839922192
        %v1561 = vunpack.c.0.s8 %v1560
        %v1562 = vlaneseq
        %v1563 = vshrl.u32 %v1562, 7
        %v1564 = vsub.s32 %v1561, %v1563
        %v1565 = vrot.slane %v1342, %v1564
        %v1567 = vunpack.c.l.s4 1985246804
        %v1568 = vunpack.c.0.s8 %v1567
        %v1569 = vlaneseq
        %v1570 = vshrl.u32 %v1569, 7
        %v1571 = vsub.s32 %v1568, %v1570
        %v1572 = vrot.slane %v1342, %v1571
        %v1574 = vunpack.c.l.s4 839922192
        %v1575 = vunpack.c.0.s8 %v1574
        %v1576 = vlaneseq
        %v1577 = vshrl.u32 %v1576, 7
        %v1578 = vsub.s32 %v1575, %v1577
        %v1579 = vrot.slane %v1346, %v1578
        %v1581 = vunpack.c.l.s4 1985246804
        %v1582 = vunpack.c.0.s8 %v1581
        %v1583 = vlaneseq
        %v1584 = vshrl.u32 %v1583, 7
        %v1585 = vsub.s32 %v1582, %v1584
        %v1586 = vrot.slane %v1346, %v1585
        %v1588 = vunpack.c.l.s4 839922192
        %v1589 = vunpack.c.0.s8 %v1588
        %v1590 = vlaneseq
        %v1591 = vshrl.u32 %v1590, 7
        %v1592 = vsub.s32 %v1589, %v1591
        %v1593 = vrot.slane %v1350, %v1592
        %v1595 = vunpack.c.l.s4 1985246804
        %v1596 = vunpack.c.0.s8 %v1595
        %v1597 = vlaneseq
        %v1598 = vshrl.u32 %v1597, 7
        %v1599 = vsub.s32 %v1596, %v1598
        %v1600 = vrot.slane %v1350, %v1599
        %v1602 = vunpack.c.l.s4 839922192
        %v1603 = vunpack.c.0.s8 %v1602
        %v1604 = vlaneseq
        %v1605 = vshrl.u32 %v1604, 7
        %v1606 = vsub.s32 %v1603, %v1605
        %v1607 = vrot.slane %v1354, %v1606
        %v1609 = vunpack.c.l.s4 1985246804
        %v1610 = vunpack.c.0.s8 %v1609
        %v1611 = vlaneseq
        %v1612 = vshrl.u32 %v1611, 7
        %v1613 = vsub.s32 %v1610, %v1612
        %v1614 = vrot.slane %v1354, %v1613
        %v1616 = vunpack.c.l.s4 839922192
        %v1617 = vunpack.c.0.s8 %v1616
        %v1618 = vlaneseq
        %v1619 = vshrl.u32 %v1618, 7
        %v1620 = vsub.s32 %v1617, %v1619
        %v1621 = vrot.slane %v1358, %v1620
        %v1623 = vunpack.c.l.s4 1985246804
        %v1624 = vunpack.c.0.s8 %v1623
        %v1625 = vlaneseq
        %v1626 = vshrl.u32 %v1625, 7
        %v1627 = vsub.s32 %v1624, %v1626
        %v1628 = vrot.slane %v1358, %v1627
        %v1630 = vunpack.c.l.s4 839922192
        %v1631 = vunpack.c.0.s8 %v1630
        %v1632 = vlaneseq
        %v1633 = vshrl.u32 %v1632, 7
        %v1634 = vsub.s32 %v1631, %v1633
        %v1635 = vrot.slane %v1362, %v1634
        %v1637 = vunpack.c.l.s4 1985246804
        %v1638 = vunpack.c.0.s8 %v1637
        %v1639 = vlaneseq
        %v1640 = vshrl.u32 %v1639, 7
        %v1641 = vsub.s32 %v1638, %v1640
        %v1642 = vrot.slane %v1362, %v1641
        %v1644 = vunpack.c.l.s4 839922192
        %v1645 = vunpack.c.0.s8 %v1644
        %v1646 = vlaneseq
        %v1647 = vshrl.u32 %v1646, 7
        %v1648 = vsub.s32 %v1645, %v1647
        %v1649 = vrot.slane %v1366, %v1648
        %v1651 = vunpack.c.l.s4 1985246804
        %v1652 = vunpack.c.0.s8 %v1651
        %v1653 = vlaneseq
        %v1654 = vshrl.u32 %v1653, 7
        %v1655 = vsub.s32 %v1652, %v1654
        %v1656 = vrot.slane %v1366, %v1655
        %v1658 = vunpack.c.l.s4 839922192
        %v1659 = vunpack.c.0.s8 %v1658
        %v1660 = vlaneseq
        %v1661 = vshrl.u32 %v1660, 7
        %v1662 = vsub.s32 %v1659, %v1661
        %v1663 = vrot.slane %v1370, %v1662
        %v1665 = vunpack.c.l.s4 1985246804
        %v1666 = vunpack.c.0.s8 %v1665
        %v1667 = vlaneseq
        %v1668 = vshrl.u32 %v1667, 7
        %v1669 = vsub.s32 %v1666, %v1668
        %v1670 = vrot.slane %v1370, %v1669
        %v1672 = vunpack.c.l.s4 839922192
        %v1673 = vunpack.c.0.s8 %v1672
        %v1674 = vlaneseq
        %v1675 = vshrl.u32 %v1674, 7
        %v1676 = vsub.s32 %v1673, %v1675
        %v1677 = vrot.slane %v1374, %v1676
        %v1679 = vunpack.c.l.s4 1985246804
        %v1680 = vunpack.c.0.s8 %v1679
        %v1681 = vlaneseq
        %v1682 = vshrl.u32 %v1681, 7
        %v1683 = vsub.s32 %v1680, %v1682
        %v1684 = vrot.slane %v1374, %v1683
        %v1686 = vunpack.c.l.s4 839922192
        %v1687 = vunpack.c.0.s8 %v1686
        %v1688 = vlaneseq
        %v1689 = vshrl.u32 %v1688, 7
        %v1690 = vsub.s32 %v1687, %v1689
        %v1691 = vrot.slane %v1378, %v1690
        %v1693 = vunpack.c.l.s4 1985246804
        %v1694 = vunpack.c.0.s8 %v1693
        %v1695 = vlaneseq
        %v1696 = vshrl.u32 %v1695, 7
        %v1697 = vsub.s32 %v1694, %v1696
        %v1698 = vrot.slane %v1378, %v1697
        %v1700 = vunpack.c.l.s4 839922192
        %v1701 = vunpack.c.0.s8 %v1700
        %v1702 = vlaneseq
        %v1703 = vshrl.u32 %v1702, 7
        %v1704 = vsub.s32 %v1701, %v1703
        %v1705 = vrot.slane %v1382, %v1704
        %v1707 = vunpack.c.l.s4 1985246804
        %v1708 = vunpack.c.0.s8 %v1707
        %v1709 = vlaneseq
        %v1710 = vshrl.u32 %v1709, 7
        %v1711 = vsub.s32 %v1708, %v1710
        %v1712 = vrot.slane %v1382, %v1711
        %v1714 = vunpack.c.l.s4 839922192
        %v1715 = vunpack.c.0.s8 %v1714
        %v1716 = vlaneseq
        %v1717 = vshrl.u32 %v1716, 7
        %v1718 = vsub.s32 %v1715, %v1717
        %v1719 = vrot.slane %v1386, %v1718
        %v1721 = vunpack.c.l.s4 1985246804
        %v1722 = vunpack.c.0.s8 %v1721
        %v1723 = vlaneseq
        %v1724 = vshrl.u32 %v1723, 7
        %v1725 = vsub.s32 %v1722, %v1724
        %v1726 = vrot.slane %v1386, %v1725
        %v1728 = vunpack.c.l.s4 839922192
        %v1729 = vunpack.c.0.s8 %v1728
        %v1730 = vlaneseq
        %v1731 = vshrl.u32 %v1730, 7
        %v1732 = vsub.s32 %v1729, %v1731
        %v1733 = vrot.slane %v1390, %v1732
        %v1735 = vunpack.c.l.s4 1985246804
        %v1736 = vunpack.c.0.s8 %v1735
        %v1737 = vlaneseq
        %v1738 = vshrl.u32 %v1737, 7
        %v1739 = vsub.s32 %v1736, %v1738
        %v1740 = vrot.slane %v1390, %v1739
        %v1742 = vunpack.c.l.s4 839922192
        %v1743 = vunpack.c.0.s8 %v1742
        %v1744 = vlaneseq
        %v1745 = vshrl.u32 %v1744, 7
        %v1746 = vsub.s32 %v1743, %v1745
        %v1747 = vrot.slane %v1394, %v1746
        %v1749 = vunpack.c.l.s4 1985246804
        %v1750 = vunpack.c.0.s8 %v1749
        %v1751 = vlaneseq
        %v1752 = vshrl.u32 %v1751, 7
        %v1753 = vsub.s32 %v1750, %v1752
        %v1754 = vrot.slane %v1394, %v1753
        %v1756 = vunpack.c.l.s4 839922192
        %v1757 = vunpack.c.0.s8 %v1756
        %v1758 = vlaneseq
        %v1759 = vshrl.u32 %v1758, 7
        %v1760 = vsub.s32 %v1757, %v1759
        %v1761 = vrot.slane %v1398, %v1760
        %v1763 = vunpack.c.l.s4 1985246804
        %v1764 = vunpack.c.0.s8 %v1763
        %v1765 = vlaneseq
        %v1766 = vshrl.u32 %v1765, 7
        %v1767 = vsub.s32 %v1764, %v1766
        %v1768 = vrot.slane %v1398, %v1767
        %v1770 = vunpack.c.l.s4 839922192
        %v1771 = vunpack.c.0.s8 %v1770
        %v1772 = vlaneseq
        %v1773 = vshrl.u32 %v1772, 7
        %v1774 = vsub.s32 %v1771, %v1773
        %v1775 = vrot.slane %v1402, %v1774
        %v1777 = vunpack.c.l.s4 1985246804
        %v1778 = vunpack.c.0.s8 %v1777
        %v1779 = vlaneseq
        %v1780 = vshrl.u32 %v1779, 7
        %v1781 = vsub.s32 %v1778, %v1780
        %v1782 = vrot.slane %v1402, %v1781
        %v1784 = vunpack.c.l.s4 839922192
        %v1785 = vunpack.c.0.s8 %v1784
        %v1786 = vlaneseq
        %v1787 = vshrl.u32 %v1786, 7
        %v1788 = vsub.s32 %v1785, %v1787
        %v1789 = vrot.slane %v1406, %v1788
        %v1791 = vunpack.c.l.s4 1985246804
        %v1792 = vunpack.c.0.s8 %v1791
        %v1793 = vlaneseq
        %v1794 = vshrl.u32 %v1793, 7
        %v1795 = vsub.s32 %v1792, %v1794
        %v1796 = vrot.slane %v1406, %v1795
        %v1798 = vunpack.c.l.s4 839922192
        %v1799 = vunpack.c.0.s8 %v1798
        %v1800 = vlaneseq
        %v1801 = vshrl.u32 %v1800, 7
        %v1802 = vsub.s32 %v1799, %v1801
        %v1803 = vrot.slane %v1410, %v1802
        %v1805 = vunpack.c.l.s4 1985246804
        %v1806 = vunpack.c.0.s8 %v1805
        %v1807 = vlaneseq
        %v1808 = vshrl.u32 %v1807, 7
        %v1809 = vsub.s32 %v1806, %v1808
        %v1810 = vrot.slane %v1410, %v1809
        %v1812 = vunpack.c.l.s4 839922192
        %v1813 = vunpack.c.0.s8 %v1812
        %v1814 = vlaneseq
        %v1815 = vshrl.u32 %v1814, 7
        %v1816 = vsub.s32 %v1813, %v1815
        %v1817 = vrot.slane %v1414, %v1816
        %v1819 = vunpack.c.l.s4 1985246804
        %v1820 = vunpack.c.0.s8 %v1819
        %v1821 = vlaneseq
        %v1822 = vshrl.u32 %v1821, 7
        %v1823 = vsub.s32 %v1820, %v1822
        %v1824 = vrot.slane %v1414, %v1823
        %v1826 = vunpack.c.l.s4 839922192
        %v1827 = vunpack.c.0.s8 %v1826
        %v1828 = vlaneseq
        %v1829 = vshrl.u32 %v1828, 7
        %v1830 = vsub.s32 %v1827, %v1829
        %v1831 = vrot.slane %v1418, %v1830
        %v1833 = vunpack.c.l.s4 1985246804
        %v1834 = vunpack.c.0.s8 %v1833
        %v1835 = vlaneseq
        %v1836 = vshrl.u32 %v1835, 7
        %v1837 = vsub.s32 %v1834, %v1836
        %v1838 = vrot.slane %v1418, %v1837
        %v1840 = vunpack.c.l.s4 839922192
        %v1841 = vunpack.c.0.s8 %v1840
        %v1842 = vlaneseq
        %v1843 = vshrl.u32 %v1842, 7
        %v1844 = vsub.s32 %v1841, %v1843
        %v1845 = vrot.slane %v1422, %v1844
        %v1847 = vunpack.c.l.s4 1985246804
        %v1848 = vunpack.c.0.s8 %v1847
        %v1849 = vlaneseq
        %v1850 = vshrl.u32 %v1849, 7
        %v1851 = vsub.s32 %v1848, %v1850
        %v1852 = vrot.slane %v1422, %v1851
        %v1854 = vunpack.c.l.s4 839922192
        %v1855 = vunpack.c.0.s8 %v1854
        %v1856 = vlaneseq
        %v1857 = vshrl.u32 %v1856, 7
        %v1858 = vsub.s32 %v1855, %v1857
        %v1859 = vrot.slane %v1426, %v1858
        %v1861 = vunpack.c.l.s4 1985246804
        %v1862 = vunpack.c.0.s8 %v1861
        %v1863 = vlaneseq
        %v1864 = vshrl.u32 %v1863, 7
        %v1865 = vsub.s32 %v1862, %v1864
        %v1866 = vrot.slane %v1426, %v1865
        %v1868 = vunpack.c.l.s4 839922192
        %v1869 = vunpack.c.0.s8 %v1868
        %v1870 = vlaneseq
        %v1871 = vshrl.u32 %v1870, 7
        %v1872 = vsub.s32 %v1869, %v1871
        %v1873 = vrot.slane %v1430, %v1872
        %v1875 = vunpack.c.l.s4 1985246804
        %v1876 = vunpack.c.0.s8 %v1875
        %v1877 = vlaneseq
        %v1878 = vshrl.u32 %v1877, 7
        %v1879 = vsub.s32 %v1876, %v1878
        %v1880 = vrot.slane %v1430, %v1879
        %v1882 = vunpack.c.l.s4 839922192
        %v1883 = vunpack.c.0.s8 %v1882
        %v1884 = vlaneseq
        %v1885 = vshrl.u32 %v1884, 7
        %v1886 = vsub.s32 %v1883, %v1885
        %v1887 = vrot.slane %v1434, %v1886
        %v1889 = vunpack.c.l.s4 1985246804
        %v1890 = vunpack.c.0.s8 %v1889
        %v1891 = vlaneseq
        %v1892 = vshrl.u32 %v1891, 7
        %v1893 = vsub.s32 %v1890, %v1892
        %v1894 = vrot.slane %v1434, %v1893
        %v1896 = vunpack.c.l.s4 839922192
        %v1897 = vunpack.c.0.s8 %v1896
        %v1898 = vlaneseq
        %v1899 = vshrl.u32 %v1898, 7
        %v1900 = vsub.s32 %v1897, %v1899
        %v1901 = vrot.slane %v1438, %v1900
        %v1903 = vunpack.c.l.s4 1985246804
        %v1904 = vunpack.c.0.s8 %v1903
        %v1905 = vlaneseq
        %v1906 = vshrl.u32 %v1905, 7
        %v1907 = vsub.s32 %v1904, %v1906
        %v1908 = vrot.slane %v1438, %v1907
        %v1910 = vunpack.c.l.s4 839922192
        %v1911 = vunpack.c.0.s8 %v1910
        %v1912 = vlaneseq
        %v1913 = vshrl.u32 %v1912, 7
        %v1914 = vsub.s32 %v1911, %v1913
        %v1915 = vrot.slane %v1442, %v1914
        %v1917 = vunpack.c.l.s4 1985246804
        %v1918 = vunpack.c.0.s8 %v1917
        %v1919 = vlaneseq
        %v1920 = vshrl.u32 %v1919, 7
        %v1921 = vsub.s32 %v1918, %v1920
        %v1922 = vrot.slane %v1442, %v1921
        %v1987 = vmul.bf16 %v251, %v1481
        %v1988 = vmul.bf16 %v252, %v1488
        %v1989 = vmul.bf16 %v253, %v1495
        %v1990 = vmul.bf16 %v254, %v1502
        %v1991 = vmul.bf16 %v255, %v1509
        %v1992 = vmul.bf16 %v256, %v1516
        %v1993 = vmul.bf16 %v257, %v1523
        %v1994 = vmul.bf16 %v258, %v1530
        %v1995 = vmul.bf16 %v267, %v1537
        %v1996 = vmul.bf16 %v268, %v1544
        %v1997 = vmul.bf16 %v269, %v1551
        %v1998 = vmul.bf16 %v270, %v1558
        %v1999 = vmul.bf16 %v271, %v1565
        %v2000 = vmul.bf16 %v272, %v1572
        %v2001 = vmul.bf16 %v273, %v1579
        %v2002 = vmul.bf16 %v274, %v1586
        %v2003 = vmul.bf16 %v283, %v1593
        %v2004 = vmul.bf16 %v284, %v1600
        %v2005 = vmul.bf16 %v285, %v1607
        %v2006 = vmul.bf16 %v286, %v1614
        %v2007 = vmul.bf16 %v287, %v1621
        %v2008 = vmul.bf16 %v288, %v1628
        %v2009 = vmul.bf16 %v289, %v1635
        %v2010 = vmul.bf16 %v290, %v1642
        %v2011 = vmul.bf16 %v299, %v1649
        %v2012 = vmul.bf16 %v300, %v1656
        %v2013 = vmul.bf16 %v301, %v1663
        %v2014 = vmul.bf16 %v302, %v1670
        %v2015 = vmul.bf16 %v303, %v1677
        %v2016 = vmul.bf16 %v304, %v1684
        %v2017 = vmul.bf16 %v305, %v1691
        %v2018 = vmul.bf16 %v306, %v1698
        %v2019 = vmul.bf16 %v315, %v1705
        %v2020 = vmul.bf16 %v316, %v1712
        %v2021 = vmul.bf16 %v317, %v1719
        %v2022 = vmul.bf16 %v318, %v1726
        %v2023 = vmul.bf16 %v319, %v1733
        %v2024 = vmul.bf16 %v320, %v1740
        %v2025 = vmul.bf16 %v321, %v1747
        %v2026 = vmul.bf16 %v322, %v1754
        %v2027 = vmul.bf16 %v331, %v1761
        %v2028 = vmul.bf16 %v332, %v1768
        %v2029 = vmul.bf16 %v333, %v1775
        %v2030 = vmul.bf16 %v334, %v1782
        %v2031 = vmul.bf16 %v335, %v1789
        %v2032 = vmul.bf16 %v336, %v1796
        %v2033 = vmul.bf16 %v337, %v1803
        %v2034 = vmul.bf16 %v338, %v1810
        %v2035 = vmul.bf16 %v347, %v1817
        %v2036 = vmul.bf16 %v348, %v1824
        %v2037 = vmul.bf16 %v349, %v1831
        %v2038 = vmul.bf16 %v350, %v1838
        %v2039 = vmul.bf16 %v351, %v1845
        %v2040 = vmul.bf16 %v352, %v1852
        %v2041 = vmul.bf16 %v353, %v1859
        %v2042 = vmul.bf16 %v354, %v1866
        %v2043 = vmul.bf16 %v363, %v1873
        %v2044 = vmul.bf16 %v364, %v1880
        %v2045 = vmul.bf16 %v365, %v1887
        %v2046 = vmul.bf16 %v366, %v1894
        %v2047 = vmul.bf16 %v367, %v1901
        %v2048 = vmul.bf16 %v368, %v1908
        %v2049 = vmul.bf16 %v369, %v1915
        %v2050 = vmul.bf16 %v370, %v1922
        %v2051 = vunpack.c.l.bf16 %v1987
        %v2052 = vunpack.c.l.bf16 %v1988
        %v2053 = vunpack.c.l.bf16 %v1989
        %v2054 = vunpack.c.l.bf16 %v1990
        %v2055 = vunpack.c.l.bf16 %v1991
        %v2056 = vunpack.c.l.bf16 %v1992
        %v2057 = vunpack.c.l.bf16 %v1993
        %v2058 = vunpack.c.l.bf16 %v1994
        %v2059 = vunpack.c.l.bf16 %v1995
        %v2060 = vunpack.c.l.bf16 %v1996
        %v2061 = vunpack.c.l.bf16 %v1997
        %v2062 = vunpack.c.l.bf16 %v1998
        %v2063 = vunpack.c.l.bf16 %v1999
        %v2064 = vunpack.c.l.bf16 %v2000
        %v2065 = vunpack.c.l.bf16 %v2001
        %v2066 = vunpack.c.l.bf16 %v2002
        %v2067 = vunpack.c.l.bf16 %v2003
        %v2068 = vunpack.c.l.bf16 %v2004
        %v2069 = vunpack.c.l.bf16 %v2005
        %v2070 = vunpack.c.l.bf16 %v2006
        %v2071 = vunpack.c.l.bf16 %v2007
        %v2072 = vunpack.c.l.bf16 %v2008
        %v2073 = vunpack.c.l.bf16 %v2009
        %v2074 = vunpack.c.l.bf16 %v2010
        %v2075 = vunpack.c.l.bf16 %v2011
        %v2076 = vunpack.c.l.bf16 %v2012
        %v2077 = vunpack.c.l.bf16 %v2013
        %v2078 = vunpack.c.l.bf16 %v2014
        %v2079 = vunpack.c.l.bf16 %v2015
        %v2080 = vunpack.c.l.bf16 %v2016
        %v2081 = vunpack.c.l.bf16 %v2017
        %v2082 = vunpack.c.l.bf16 %v2018
        %v2083 = vunpack.c.l.bf16 %v2019
        %v2084 = vunpack.c.l.bf16 %v2020
        %v2085 = vunpack.c.l.bf16 %v2021
        %v2086 = vunpack.c.l.bf16 %v2022
        %v2087 = vunpack.c.l.bf16 %v2023
        %v2088 = vunpack.c.l.bf16 %v2024
        %v2089 = vunpack.c.l.bf16 %v2025
        %v2090 = vunpack.c.l.bf16 %v2026
        %v2091 = vunpack.c.l.bf16 %v2027
        %v2092 = vunpack.c.l.bf16 %v2028
        %v2093 = vunpack.c.l.bf16 %v2029
        %v2094 = vunpack.c.l.bf16 %v2030
        %v2095 = vunpack.c.l.bf16 %v2031
        %v2096 = vunpack.c.l.bf16 %v2032
        %v2097 = vunpack.c.l.bf16 %v2033
        %v2098 = vunpack.c.l.bf16 %v2034
        %v2099 = vunpack.c.l.bf16 %v2035
        %v2100 = vunpack.c.l.bf16 %v2036
        %v2101 = vunpack.c.l.bf16 %v2037
        %v2102 = vunpack.c.l.bf16 %v2038
        %v2103 = vunpack.c.l.bf16 %v2039
        %v2104 = vunpack.c.l.bf16 %v2040
        %v2105 = vunpack.c.l.bf16 %v2041
        %v2106 = vunpack.c.l.bf16 %v2042
        %v2107 = vunpack.c.l.bf16 %v2043
        %v2108 = vunpack.c.l.bf16 %v2044
        %v2109 = vunpack.c.l.bf16 %v2045
        %v2110 = vunpack.c.l.bf16 %v2046
        %v2111 = vunpack.c.l.bf16 %v2047
        %v2112 = vunpack.c.l.bf16 %v2048
        %v2113 = vunpack.c.l.bf16 %v2049
        %v2114 = vunpack.c.l.bf16 %v2050
        %v2115 = vadd.f32 %v2051, %v2052
        %v2116 = vadd.f32 %v2115, %v2053
        %v2117 = vadd.f32 %v2116, %v2054
        %v2118 = vadd.f32 %v2117, %v2055
        %v2119 = vadd.f32 %v2118, %v2056
        %v2120 = vadd.f32 %v2119, %v2057
        %v2121 = vadd.f32 %v2120, %v2058
        %v2122 = vrot.slane %v2121, 4
        %v2123 = vadd.f32 %v2121, %v2122
        %v2124 = vrot.slane %v2123, 2
        %v2125 = vadd.f32 %v2123, %v2124
        %v2126 = vrot.slane %v2125, 1
        %v2127 = vadd.f32 %v2125, %v2126
        %v2128 = vadd.f32 %v2059, %v2060
        %v2129 = vadd.f32 %v2128, %v2061
        %v2130 = vadd.f32 %v2129, %v2062
        %v2131 = vadd.f32 %v2130, %v2063
        %v2132 = vadd.f32 %v2131, %v2064
        %v2133 = vadd.f32 %v2132, %v2065
        %v2134 = vadd.f32 %v2133, %v2066
        %v2135 = vrot.slane %v2134, 4
        %v2136 = vadd.f32 %v2134, %v2135
        %v2137 = vrot.slane %v2136, 2
        %v2138 = vadd.f32 %v2136, %v2137
        %v2139 = vrot.slane %v2138, 1
        %v2140 = vadd.f32 %v2138, %v2139
        %v2141 = vadd.f32 %v2067, %v2068
        %v2142 = vadd.f32 %v2141, %v2069
        %v2143 = vadd.f32 %v2142, %v2070
        %v2144 = vadd.f32 %v2143, %v2071
        %v2145 = vadd.f32 %v2144, %v2072
        %v2146 = vadd.f32 %v2145, %v2073
        %v2147 = vadd.f32 %v2146, %v2074
        %v2148 = vrot.slane %v2147, 4
        %v2149 = vadd.f32 %v2147, %v2148
        %v2150 = vrot.slane %v2149, 2
        %v2151 = vadd.f32 %v2149, %v2150
        %v2152 = vrot.slane %v2151, 1
        %v2153 = vadd.f32 %v2151, %v2152
        %v2154 = vadd.f32 %v2075, %v2076
        %v2155 = vadd.f32 %v2154, %v2077
        %v2156 = vadd.f32 %v2155, %v2078
        %v2157 = vadd.f32 %v2156, %v2079
        %v2158 = vadd.f32 %v2157, %v2080
        %v2159 = vadd.f32 %v2158, %v2081
        %v2160 = vadd.f32 %v2159, %v2082
        %v2161 = vrot.slane %v2160, 4
        %v2162 = vadd.f32 %v2160, %v2161
        %v2163 = vrot.slane %v2162, 2
        %v2164 = vadd.f32 %v2162, %v2163
        %v2165 = vrot.slane %v2164, 1
        %v2166 = vadd.f32 %v2164, %v2165
        %v2167 = vadd.f32 %v2083, %v2084
        %v2168 = vadd.f32 %v2167, %v2085
        %v2169 = vadd.f32 %v2168, %v2086
        %v2170 = vadd.f32 %v2169, %v2087
        %v2171 = vadd.f32 %v2170, %v2088
        %v2172 = vadd.f32 %v2171, %v2089
        %v2173 = vadd.f32 %v2172, %v2090
        %v2174 = vrot.slane %v2173, 4
        %v2175 = vadd.f32 %v2173, %v2174
        %v2176 = vrot.slane %v2175, 2
        %v2177 = vadd.f32 %v2175, %v2176
        %v2178 = vrot.slane %v2177, 1
        %v2179 = vadd.f32 %v2177, %v2178
        %v2180 = vadd.f32 %v2091, %v2092
        %v2181 = vadd.f32 %v2180, %v2093
        %v2182 = vadd.f32 %v2181, %v2094
        %v2183 = vadd.f32 %v2182, %v2095
        %v2184 = vadd.f32 %v2183, %v2096
        %v2185 = vadd.f32 %v2184, %v2097
        %v2186 = vadd.f32 %v2185, %v2098
        %v2187 = vrot.slane %v2186, 4
        %v2188 = vadd.f32 %v2186, %v2187
        %v2189 = vrot.slane %v2188, 2
        %v2190 = vadd.f32 %v2188, %v2189
        %v2191 = vrot.slane %v2190, 1
        %v2192 = vadd.f32 %v2190, %v2191
        %v2193 = vadd.f32 %v2099, %v2100
        %v2194 = vadd.f32 %v2193, %v2101
        %v2195 = vadd.f32 %v2194, %v2102
        %v2196 = vadd.f32 %v2195, %v2103
        %v2197 = vadd.f32 %v2196, %v2104
        %v2198 = vadd.f32 %v2197, %v2105
        %v2199 = vadd.f32 %v2198, %v2106
        %v2200 = vrot.slane %v2199, 4
        %v2201 = vadd.f32 %v2199, %v2200
        %v2202 = vrot.slane %v2201, 2
        %v2203 = vadd.f32 %v2201, %v2202
        %v2204 = vrot.slane %v2203, 1
        %v2205 = vadd.f32 %v2203, %v2204
        %v2206 = vadd.f32 %v2107, %v2108
        %v2207 = vadd.f32 %v2206, %v2109
        %v2208 = vadd.f32 %v2207, %v2110
        %v2209 = vadd.f32 %v2208, %v2111
        %v2210 = vadd.f32 %v2209, %v2112
        %v2211 = vadd.f32 %v2210, %v2113
        %v2212 = vadd.f32 %v2211, %v2114
        %v2213 = vrot.slane %v2212, 4
        %v2214 = vadd.f32 %v2212, %v2213
        %v2215 = vrot.slane %v2214, 2
        %v2216 = vadd.f32 %v2214, %v2215
        %v2217 = vrot.slane %v2216, 1
        %v2218 = vadd.f32 %v2216, %v2217
        %v2219 = vadd.f32 %v1307, %v2127
        %v2220 = vadd.f32 %v1308, %v2140
        %v2221 = vadd.f32 %v1309, %v2153
        %v2222 = vadd.f32 %v1310, %v2166
        %v2223 = vadd.f32 %v1311, %v2179
        %v2224 = vadd.f32 %v1312, %v2192
        %v2225 = vadd.f32 %v1313, %v2205
        %v2226 = vadd.f32 %v1314, %v2218
        %v2227 = vpack.c.bf16 %v2219, %v2219
        %v2228 = vpack.c.bf16 %v2220, %v2220
        %v2229 = vpack.c.bf16 %v2221, %v2221
        %v2230 = vpack.c.bf16 %v2222, %v2222
        %v2231 = vpack.c.bf16 %v2223, %v2223
        %v2232 = vpack.c.bf16 %v2224, %v2224
        %v2233 = vpack.c.bf16 %v2225, %v2225
        %v2234 = vpack.c.bf16 %v2226, %v2226
        %v2235 = vld [vmem:[#allocation7] sm:$0xf]
        %v2236 = vld [vmem:[#allocation7 + $0x4] sm:$0xf]
        %v2237 = vld [vmem:[#allocation7 + $0x8] sm:$0xf]
        %v2238 = vld [vmem:[#allocation7 + $0xc] sm:$0xf]
        %v2239 = vld [vmem:[#allocation7 + $0x10] sm:$0xf]
        %v2240 = vld [vmem:[#allocation7 + $0x14] sm:$0xf]
        %v2241 = vld [vmem:[#allocation7 + $0x18] sm:$0xf]
        %v2242 = vld [vmem:[#allocation7 + $0x1c] sm:$0xf]
        %v2243 = vld [vmem:[#allocation7 + $0x20] sm:$0xf]
        %v2244 = vld [vmem:[#allocation7 + $0x24] sm:$0xf]
        %v2245 = vld [vmem:[#allocation7 + $0x28] sm:$0xf]
        %v2246 = vld [vmem:[#allocation7 + $0x2c] sm:$0xf]
        %v2247 = vld [vmem:[#allocation7 + $0x30] sm:$0xf]
        %v2248 = vld [vmem:[#allocation7 + $0x34] sm:$0xf]
        %v2249 = vld [vmem:[#allocation7 + $0x38] sm:$0xf]
        %v2250 = vld [vmem:[#allocation7 + $0x3c] sm:$0xf]
        %v2259 = vunpack.c.l.b16 %v2227
        %v2260 = vunpack.c.l.b16 %v2228
        %v2261 = vunpack.c.l.b16 %v2229
        %v2262 = vunpack.c.l.b16 %v2230
        %v2263 = vunpack.c.l.b16 %v2231
        %v2264 = vunpack.c.l.b16 %v2232
        %v2265 = vunpack.c.l.b16 %v2233
        %v2266 = vunpack.c.l.b16 %v2234
        %vm2267 = vcmask 1041409
        %v2268 = vsel %vm2267, %v2260, %v2259
        %vm2269 = vcmask 1042434
        %v2270 = vsel %vm2269, %v2261, %v2268
        %vm2271 = vcmask 1043459
        %v2272 = vsel %vm2271, %v2262, %v2270
        %vm2273 = vcmask 1044484
        %v2274 = vsel %vm2273, %v2263, %v2272
        %vm2275 = vcmask 1045509
        %v2276 = vsel %vm2275, %v2264, %v2274
        %vm2277 = vcmask 1046534
        %v2278 = vsel %vm2277, %v2265, %v2276
        %vm2279 = vcmask 1047559
        %v2280 = vsel %vm2279, %v2266, %v2278
        %v2281 = vpack.c.b16 %v2280, %v2280
        %v2299 = vunpack.c.l.b16 %v2235
        %v2300 = vunpack.c.l.b16 %v2236
        %v2301 = vunpack.c.l.b16 %v2237
        %v2302 = vunpack.c.l.b16 %v2238
        %v2303 = vunpack.c.l.b16 %v2239
        %v2304 = vunpack.c.l.b16 %v2240
        %v2305 = vunpack.c.l.b16 %v2241
        %v2306 = vunpack.c.l.b16 %v2242
        %v2307 = vunpack.c.l.b16 %v2243
        %v2308 = vunpack.c.l.b16 %v2244
        %v2309 = vunpack.c.l.b16 %v2245
        %v2310 = vunpack.c.l.b16 %v2246
        %v2311 = vunpack.c.l.b16 %v2247
        %v2312 = vunpack.c.l.b16 %v2248
        %v2313 = vunpack.c.l.b16 %v2249
        %v2314 = vunpack.c.l.b16 %v2250
        %v2315 = vpack.c.b16 %v2300, %v2299
        %v2316 = vpack.c.b16 %v2302, %v2301
        %v2317 = vpack.c.b16 %v2304, %v2303
        %v2318 = vpack.c.b16 %v2306, %v2305
        %v2319 = vpack.c.b16 %v2308, %v2307
        %v2320 = vpack.c.b16 %v2310, %v2309
        %v2321 = vpack.c.b16 %v2312, %v2311
        %v2322 = vpack.c.b16 %v2314, %v2313
        %2331 = vmatprep.subr.bf16.mxu0 0
        %2332 = vmatpush1.bf16.msra.mxu0 %v2315
        %2333 = vmatprep.subr.bf16.mxu0 0
        %2334 = vmatpush1.bf16.msra.mxu0 %v2316
        %2335 = vmatprep.subr.bf16.mxu0 0
        %2336 = vmatpush1.bf16.msra.mxu0 %v2317
        %2337 = vmatprep.subr.bf16.mxu0 0
        %2338 = vmatpush1.bf16.msra.mxu0 %v2318
        %2339 = vmatprep.subr.bf16.mxu0 0
        %2340 = vmatpush1.bf16.msra.mxu0 %v2319
        %2341 = vmatprep.subr.bf16.mxu0 0
        %2342 = vmatpush1.bf16.msra.mxu0 %v2320
        %2343 = vmatprep.subr.bf16.mxu0 0
        %2344 = vmatpush1.bf16.msra.mxu0 %v2321
        %2345 = vmatprep.subr.bf16.mxu0 0
        %2346 = vmatpush1.bf16.msra.mxu0 %v2322
        %2347 = vmatprep.subr.bf16.mxu0 0
        %2348 = vmatpush1.bf16.msra.mxu0 0
        %2349 = vmatprep.subr.bf16.mxu0 0
        %2350 = vmatpush1.bf16.msra.mxu0 0
        %2351 = vmatprep.subr.bf16.mxu0 0
        %2352 = vmatpush1.bf16.msra.mxu0 0
        %2353 = vmatprep.subr.bf16.mxu0 0
        %2354 = vmatpush1.bf16.msra.mxu0 0
        %2355 = vmatprep.subr.bf16.mxu0 0
        %2356 = vmatpush1.bf16.msra.mxu0 0
        %2357 = vmatprep.subr.bf16.mxu0 0
        %2358 = vmatpush1.bf16.msra.mxu0 0
        %2359 = vmatprep.subr.bf16.mxu0 0
        %2360 = vmatpush1.bf16.msra.mxu0 0
        %2361 = vmatprep.subr.bf16.mxu0 0
        %2362 = vmatpush1.bf16.msra.mxu0 0
        %2363 = vmatprep.mubr.bf16.mxu0 0
        %2364 = vmatmul.mubr.bf16.gmra.mrb[0].mxu0 %v2281
        %v2365 = vpop.f32.mrb[0].mxu0
        %v2366 = vadd.f32 0.0, %v2365
        %v2367 = vpop.f32.mrb[0].mxu0
        %v2368 = vpop.f32.mrb[0].mxu0
        %v2369 = vpop.f32.mrb[0].mxu0
        %2370 = vdwg.mxu0
        %2371 = vadd.xlane.f32.xlu0 %v371
        %v2372 = vpop.xlane.xlu0 %2371
        %v2373 = vmax.f32 %v2372, 1e-09
        %v2374 = vrcp.pop %v2373
        %v2375 = vmul.f32 %v2366, %v2374
        %2376 = vst [vmem:[%s240] sm:$0xff] %v2375
        %s2377 = sand.u32 %s104, 1
        %s2378 = scalar_lea.sflag [#allocation4], %s2377
        %s2379 = sand.u32 %s104, 1
        %s2380 = smul.addr %s2379, 8
        %s2381 = scalar_lea.vmem [#allocation8], %s2380
        // Predicated region
        $region45: #{tpu_custom_call.1} parent=31 // pred_check
          %p2382 = pneg %p114
        $region46: #{tpu_custom_call.1} parent=31 // pred_check_branch
          %2384 = sbr.rel (%p2382) target = $region48
        $region47: #{tpu_custom_call.1} parent=31 // pred_region
          %s2386 = ssub.s32 128, 128
          %2387 = vsyncadd %s2378, %s2386
          %s2388 = smul.addr %s23, 128
          %s2389 = scalar_lea.hbm %s3, %s2388
          %s2391 = sshll.u32 %s2381, 4
          %s2392 = int_to_ptr.vmem [resolvable:$true] %s2391
          %2394 = dma.vmem_to_hbm [thread:$0]  %s2392, 128, %s2389, %s2378
        $region48: #{tpu_custom_call.1} parent=31 // pred_fallthru
          _
      $region32: #{tpu_custom_call.1} parent=5 // pred_fallthru
        _
      %p2395 = scmp.le.s32.totalorder 2, %s18
      // Predicated region
      $region49: #{tpu_custom_call.1} parent=5 // pred_check
        %p2396 = pneg %p2395
      $region50: #{tpu_custom_call.1} parent=5 // pred_check_branch
        %2398 = sbr.rel (%p2396) target = $region52
      $region51: #{tpu_custom_call.1} parent=5 // pred_region
        %s2399 = ssub.s32 %s18, 2
        // Predicated region
        $region53: #{tpu_custom_call.1} parent=51 // pred_check
          %p2400 = pneg %p120
        $region54: #{tpu_custom_call.1} parent=51 // pred_check_branch
          %2402 = sbr.rel (%p2400) target = $region56
        $region55: #{tpu_custom_call.1} parent=51 // pred_region
          %s2403 = sand.u32 %s105, 1
          %s2404 = scalar_lea.sflag [#allocation4], %s2403
          %s2405 = sand.u32 %s105, 1
          %s2406 = smul.addr %s2405, 8
          %s2407 = scalar_lea.vmem [#allocation8], %s2406
          %2408 = dma.done %s2404, 128
        $region56: #{tpu_custom_call.1} parent=51 // pred_fallthru
          _
      $region52: #{tpu_custom_call.1} parent=5 // pred_fallthru
        _
    $region6: #{tpu_custom_call.1} parent=1 // loop_footer
      %s22 = sadd.s32 1, %s18
    $region7: #{tpu_custom_call.1} parent=1 // loop_footer_branch
      %17 = sbr.rel target = $region3
    $region8: #{tpu_custom_call.1} parent=1 // loop_exit
      _
    %2409 = vsyncpa [#allocation3], 1
    %s2410 = scalar_lea.sflag [#allocation3], 1
    %2411 = vsyncpa %s2410, 1
    %2412 = vsyncpa [#allocation6], 1
    %s2413 = scalar_lea.sflag [#allocation6], 1
    %2414 = vsyncpa %s2413, 1
    %2415 = vsyncpa [#allocation4], 1
    %s2416 = scalar_lea.sflag [#allocation4], 1
    %2417 = vsyncpa %s2416, 1

</llo_original>
